<compile_context>
chip_gen: v7x
topology: tpu7x:2x2x1
jax: 0.10.0
libtpu: 0.0.40
codegen_flags: <defaults>
</compile_context>

<pallas_src>
import math

import jax
import jax.numpy as jnp
from jax import lax
from jax.experimental import pallas as pl
from jax.experimental.pallas import tpu as pltpu

LANES = 128  # pad feature dims to the vreg lane width


def _round_up(v, m):
    return (v + m - 1) // m * m


def _pad2(m, rows, cols):
    return jnp.pad(m, ((0, rows - m.shape[0]), (0, cols - m.shape[1])))


def _pad_bias(b):
    # zero-padded pad lanes stay exactly 0 through matmul / bias / ReLU
    return jnp.pad(b, (0, LANES - b.shape[0])).reshape(1, LANES).astype(jnp.float32)


# ---------------------------------------------------------------------------
# Wrapper: padding / dtype / stacking glue + single pallas_call
# ---------------------------------------------------------------------------
def gcn_forward(blocks_adj_norm, x, gcn_params, pred_params,
                pos_src, pos_dst, neg_src, neg_dst):
    n = x.shape[0]
    n_layers = len(blocks_adj_norm)
    e_pos = pos_src.shape[0]
    e_neg = neg_src.shape[0]
    e_tot = e_pos + e_neg
    e_pad = _round_up(e_tot, 8)

    # node-row padding + src-reduction tile size (TSRC must divide Np and be a
    # multiple of 128, or equal the full dim for small graphs)
    if n <= 512:
        np_ = _round_up(n, 8)
        tsrc = np_
    else:
        np_ = _round_up(n, 512)
        tsrc = 512
    kt = np_ // tsrc

    # MXU operands in bf16; zero padding is inert (zero A rows/cols, zero W
    # rows/cols, zero bias pad, ReLU(0)=0).  bf16 A / HW with f32 accumulation
    # deviates from the f32 torch reference at ~1e-2 relative on logits.
    x_p = _pad2(x, np_, LANES).astype(jnp.bfloat16)
    a_stack = jnp.stack([_pad2(a, np_, np_) for a in blocks_adj_norm]).astype(jnp.bfloat16)
    wg_stack = jnp.stack([_pad2(w, LANES, LANES) for w, _ in gcn_params]).astype(jnp.bfloat16)
    bg_stack = jnp.stack([_pad_bias(b) for _, b in gcn_params])            # (L,1,128) f32
    wp = [_pad2(w, LANES, LANES).astype(jnp.bfloat16) for w, _ in pred_params]
    bp = [_pad_bias(b) for _, b in pred_params]

    # (pos || neg) edge endpoints -> SMEM scalar-prefetch index table (2, E_pad)
    src = jnp.concatenate([pos_src, neg_src]).astype(jnp.int32)
    dst = jnp.concatenate([pos_dst, neg_dst]).astype(jnp.int32)
    idx = jnp.stack([jnp.pad(src, (0, e_pad - e_tot)),
                     jnp.pad(dst, (0, e_pad - e_tot))])

    # ---------------- kernel (closes over static tile constants) ----------------
    def kernel(idx_ref,                                   # SMEM (2, E_pad) int32
               x_ref, a_ref, wg_ref, bg_ref,              # streamed per (l, k)
               wp1_ref, wp2_ref, wp3_ref, bp1_ref, bp2_ref, bp3_ref,
               o_ref,
               h_scr, acc_scr, z_scr):
        l = pl.program_id(0)
        k = pl.program_id(1)
        nk = pl.num_programs(1)
        last_l = pl.num_programs(0) - 1

        # load input features into the resident H scratch once
        @pl.when(jnp.logical_and(l == 0, k == 0))
        def _():
            h_scr[...] = x_ref[...]

        # zero the f32 aggregation accumulator at the start of each layer
        @pl.when(k == 0)
        def _():
            acc_scr[...] = jnp.zeros_like(acc_scr)

        # src-chunk of H -> H_k @ W_l (MXU, bf16 in / f32 acc), then A-tile @ HW
        off = pl.multiple_of(k * tsrc, tsrc)
        h_k = h_scr[pl.ds(off, tsrc), :]
        hw = jnp.dot(h_k, wg_ref[0], preferred_element_type=jnp.float32)
        acc_scr[...] += jnp.dot(a_ref[0], hw.astype(jnp.bfloat16),
                                preferred_element_type=jnp.float32)

        # layer finalize (non-last layers): bias + ReLU + single f32->bf16 cast
        @pl.when(jnp.logical_and(k == nk - 1, l < last_l))
        def _():
            h_scr[...] = jnp.maximum(acc_scr[...] + bg_ref[0], 0.0).astype(jnp.bfloat16)

        # last layer: bias (no ReLU), SMEM-index gather, MLP predictor, store
        @pl.when(jnp.logical_and(k == nk - 1, l == last_l))
        def _():
            acc_scr[...] = acc_scr[...] + bg_ref[0]        # final H, kept in f32

            def gather_one(e, carry):                      # h[src] * h[dst] per edge
                s = idx_ref[0, e]
                d = idx_ref[1, e]
                z_scr[pl.ds(e, 1), :] = (acc_scr[pl.ds(s, 1), :]
                                         * acc_scr[pl.ds(d, 1), :])
                return carry
            lax.fori_loop(0, e_pad, gather_one, 0, unroll=True)

            # MLP predictor: Linear-ReLU-Linear-ReLU-Linear, all padded to 128 lanes
            z = z_scr[...].astype(jnp.bfloat16)
            z = jnp.dot(z, wp1_ref[...], preferred_element_type=jnp.float32) + bp1_ref[...]
            z = jnp.maximum(z, 0.0).astype(jnp.bfloat16)
            z = jnp.dot(z, wp2_ref[...], preferred_element_type=jnp.float32) + bp2_ref[...]
            z = jnp.maximum(z, 0.0).astype(jnp.bfloat16)
            z = jnp.dot(z, wp3_ref[...], preferred_element_type=jnp.float32) + bp3_ref[...]
            o_ref[...] = z.astype(o_ref.dtype)             # lane-dense bf16 store

    # ---------------- specs / grid ----------------
    in_specs = [
        pl.BlockSpec((np_, LANES), lambda l, k, idx: (0, 0)),          # x (once)
        pl.BlockSpec((1, np_, tsrc), lambda l, k, idx: (l, 0, k)),     # A streamed
        pl.BlockSpec((1, LANES, LANES), lambda l, k, idx: (l, 0, 0)),  # W_l
        pl.BlockSpec((1, 1, LANES), lambda l, k, idx: (l, 0, 0)),      # b_l
        pl.BlockSpec((LANES, LANES), lambda l, k, idx: (0, 0)),        # wp1
        pl.BlockSpec((LANES, LANES), lambda l, k, idx: (0, 0)),        # wp2
        pl.BlockSpec((LANES, LANES), lambda l, k, idx: (0, 0)),        # wp3
        pl.BlockSpec((1, LANES), lambda l, k, idx: (0, 0)),            # bp1
        pl.BlockSpec((1, LANES), lambda l, k, idx: (0, 0)),            # bp2
        pl.BlockSpec((1, LANES), lambda l, k, idx: (0, 0)),            # bp3
    ]
    out_spec = pl.BlockSpec((e_pad, LANES), lambda l, k, idx: (0, 0))
    scratch = [
        pltpu.VMEM((np_, LANES), jnp.bfloat16),    # resident H
        pltpu.VMEM((np_, LANES), jnp.float32),     # layer accumulator
        pltpu.VMEM((e_pad, LANES), jnp.float32),   # gathered edge features
    ]

    # derive vmem_limit from actual block/scratch bytes (double-buffered inputs)
    in_block_bytes = (np_ * LANES * 2 + np_ * tsrc * 2 + LANES * LANES * 2 + LANES * 4
                      + 3 * LANES * LANES * 2 + 3 * LANES * 4)
    out_block_bytes = e_pad * LANES * 2
    scratch_bytes = np_ * LANES * 2 + np_ * LANES * 4 + e_pad * LANES * 4
    needed = 2 * in_block_bytes + 2 * out_block_bytes + scratch_bytes
    # TODO(synk): cap at ~56 MiB (and re-derive tsrc) when targeting v7x's 64 MiB VMEM.
    vmem_limit = int(min(max(2 * needed + (2 << 20), 16 << 20), 96 << 20))

    flops = (n_layers * (2 * np_ * LANES * LANES + 2 * np_ * np_ * LANES)
             + 3 * 2 * e_pad * LANES * LANES)
    operands = (idx, x_p, a_stack, wg_stack, bg_stack,
                wp[0], wp[1], wp[2], bp[0], bp[1], bp[2])
    bytes_accessed = (sum(int(o.size) * o.dtype.itemsize for o in operands)
                      + e_pad * LANES * 2)
    cost = pl.CostEstimate(flops=flops, transcendentals=0,
                           bytes_accessed=bytes_accessed)

    out = pl.pallas_call(
        kernel,
        out_shape=jax.ShapeDtypeStruct((e_pad, LANES), jnp.bfloat16),
        grid_spec=pltpu.PrefetchScalarGridSpec(
            num_scalar_prefetch=1,
            grid=(n_layers, kt),
            in_specs=in_specs,
            out_specs=out_spec,
            scratch_shapes=scratch,
        ),
        compiler_params=pltpu.CompilerParams(
            # layer axis carries H across layers, src axis is a reduction
            dimension_semantics=("arbitrary", "arbitrary"),
            vmem_limit_bytes=vmem_limit,
        ),
        cost_estimate=cost,
    )(*operands)

    logits = out[:e_tot, :1].astype(jnp.float32)   # lane 0 holds the real logit
    return logits[:e_pos], logits[e_pos:]


# ---------------------------------------------------------------------------
# Parameter / input construction
# ---------------------------------------------------------------------------
def glorot(key, shape):
    fan_in, fan_out = shape
    limit = (6.0 / (fan_in + fan_out)) ** 0.5
    return jax.random.uniform(key, shape, jnp.float32, -limit, limit)


def normalize_adjacency(adj01, edge_w):
    # DGL GraphConv norm='both' with allow_zero_in_degree=True:
    #   D_out^{-1/2} (src/out-degree) and D_in^{-1/2} (dst/in-degree),
    #   structural degrees clamped to min 1; edge weights scale messages.
    out_deg = jnp.clip(adj01.sum(axis=0), 1.0, None)   # per-src column sums
    in_deg = jnp.clip(adj01.sum(axis=1), 1.0, None)    # per-dst row sums
    a = adj01 * edge_w
    a = a * (out_deg ** -0.5)[None, :]
    a = a * (in_deg ** -0.5)[:, None]
    return a.astype(jnp.float32)


if __name__ == "__main__":
    key = jax.random.PRNGKey(0)
    N = 16           # nodes per block (src == dst for simplicity)
    IN_SIZE = 8
    HID = 32
    E_POS = 8
    E_NEG = 8
    N_LAYERS = 3

    keys = jax.random.split(key, 32)
    ki = iter(keys)

    # node features
    x = jax.random.normal(next(ki), (N, IN_SIZE), jnp.float32)

    # blocks: dense 0/1 adjacency + per-layer edge weights, then normalize
    blocks_adj_norm = []
    for _ in range(N_LAYERS):
        adj01 = jax.random.bernoulli(next(ki), 0.3, (N, N)).astype(jnp.float32)
        ew = jax.random.uniform(next(ki), (N, N), jnp.float32, 0.5, 1.5)
        blocks_adj_norm.append(normalize_adjacency(adj01, ew))

    # GraphConv params: weight (in, out) glorot, bias zeros
    gcn_params = []
    for din, dout in [(IN_SIZE, HID), (HID, HID), (HID, HID)]:
        gcn_params.append((glorot(next(ki), (din, dout)),
                           jnp.zeros((dout,), jnp.float32)))

    # predictor params: Linear(hid,hid), Linear(hid,hid), Linear(hid,1)
    # stored as (in, out) matrices (transpose of torch's (out, in))
    pred_params = []
    for din, dout in [(HID, HID), (HID, HID), (HID, 1)]:
        pred_params.append((glorot(next(ki), (din, dout)),
                            jnp.zeros((dout,), jnp.float32)))

    # positive / negative edge endpoint indices
    pos_src = jax.random.randint(next(ki), (E_POS,), 0, N)
    pos_dst = jax.random.randint(next(ki), (E_POS,), 0, N)
    neg_src = jax.random.randint(next(ki), (E_NEG,), 0, N)
    neg_dst = jax.random.randint(next(ki), (E_NEG,), 0, N)

    h_pos, h_neg = jax.jit(gcn_forward)(
        blocks_adj_norm, x, gcn_params, pred_params,
        pos_src, pos_dst, neg_src, neg_dst)
    jax.block_until_ready((h_pos, h_neg))

    assert h_pos.shape == (E_POS, 1) and h_neg.shape == (E_NEG, 1)
    print("KERNEL_OK")
</pallas_src>

<mosaic_0001>
module attributes {stable_mosaic.version = 11 : i64} {
  func.func @kernel(%arg0: i32, %arg1: i32, %arg2: memref<2x16xi32, #tpu.memory_space<smem>>, %arg3: memref<16x128xbf16, #tpu.memory_space<vmem>>, %arg4: memref<1x16x16xbf16, #tpu.memory_space<vmem>>, %arg5: memref<1x128x128xbf16, #tpu.memory_space<vmem>>, %arg6: memref<1x1x128xf32, #tpu.memory_space<vmem>>, %arg7: memref<128x128xbf16, #tpu.memory_space<vmem>>, %arg8: memref<128x128xbf16, #tpu.memory_space<vmem>>, %arg9: memref<128x128xbf16, #tpu.memory_space<vmem>>, %arg10: memref<1x128xf32, #tpu.memory_space<vmem>>, %arg11: memref<1x128xf32, #tpu.memory_space<vmem>>, %arg12: memref<1x128xf32, #tpu.memory_space<vmem>>, %arg13: memref<16x128xbf16, #tpu.memory_space<vmem>>, %arg14: memref<16x128xbf16, #tpu.memory_space<vmem>>, %arg15: memref<16x128xf32, #tpu.memory_space<vmem>>, %arg16: memref<16x128xf32, #tpu.memory_space<vmem>>) attributes {dimension_semantics = [#tpu.dimension_semantics<arbitrary>, #tpu.dimension_semantics<arbitrary>], iteration_bounds = array<i64: 3, 1>, scalar_prefetch = 1 : i64, scratch_operands = 3 : i64, tpu.core_type = #tpu.core_type<tc>, window_params = [{pipeline_mode = #tpu.pipeline_mode<synchronous>, transform_indices = @transform_0, window_bounds = array<i64: 16, 128>}, {transform_indices = @transform_1, window_bounds = array<i64: 1, 16, 16>}, {transform_indices = @transform_2, window_bounds = array<i64: 1, 128, 128>}, {transform_indices = @transform_3, window_bounds = array<i64: 1, 1, 128>}, {pipeline_mode = #tpu.pipeline_mode<synchronous>, transform_indices = @transform_4, window_bounds = array<i64: 128, 128>}, {pipeline_mode = #tpu.pipeline_mode<synchronous>, transform_indices = @transform_5, window_bounds = array<i64: 128, 128>}, {pipeline_mode = #tpu.pipeline_mode<synchronous>, transform_indices = @transform_6, window_bounds = array<i64: 128, 128>}, {pipeline_mode = #tpu.pipeline_mode<synchronous>, transform_indices = @transform_7, window_bounds = array<i64: 1, 128>}, {pipeline_mode = #tpu.pipeline_mode<synchronous>, transform_indices = @transform_8, window_bounds = array<i64: 1, 128>}, {pipeline_mode = #tpu.pipeline_mode<synchronous>, transform_indices = @transform_9, window_bounds = array<i64: 1, 128>}, {pipeline_mode = #tpu.pipeline_mode<synchronous>, transform_indices = @transform_10, window_bounds = array<i64: 16, 128>}]} {
    %c0_i32 = arith.constant 0 : i32
    %0 = arith.cmpi eq, %arg0, %c0_i32 : i32
    %c0_i32_0 = arith.constant 0 : i32
    %1 = arith.cmpi eq, %arg1, %c0_i32_0 : i32
    %2 = arith.andi %0, %1 : i1
    %3 = arith.extui %2 : i1 to i32
    %c0_i32_1 = arith.constant 0 : i32
    %4 = arith.cmpi ne, %3, %c0_i32_1 : i32
    scf.if %4 {
      %c0_20 = arith.constant 0 : index
      %c0_21 = arith.constant 0 : index
      %32 = vector.load %arg3[%c0_20, %c0_21] : memref<16x128xbf16, #tpu.memory_space<vmem>>, vector<16x128xbf16>
      %c0_22 = arith.constant 0 : index
      %c0_23 = arith.constant 0 : index
      %33 = vector.load %arg14[%c0_22, %c0_23] : memref<16x128xbf16, #tpu.memory_space<vmem>>, vector<16x128xbf16>
      tpu.vector_store %arg14[%c0_22, %c0_23], %32 {strides = array<i32>} : memref<16x128xbf16, #tpu.memory_space<vmem>>, vector<16x128xbf16>,
    } else {
    }
    %c0_i32_2 = arith.constant 0 : i32
    %5 = arith.cmpi eq, %arg1, %c0_i32_2 : i32
    %6 = arith.extui %5 : i1 to i32
    %c0_i32_3 = arith.constant 0 : i32
    %7 = arith.cmpi ne, %6, %c0_i32_3 : i32
    scf.if %7 {
      %cst_20 = arith.constant 0.000000e+00 : f32
      %32 = vector.broadcast %cst_20 : f32 to vector<16x128xf32>
      %c0_21 = arith.constant 0 : index
      %c0_22 = arith.constant 0 : index
      %33 = vector.load %arg15[%c0_21, %c0_22] : memref<16x128xf32, #tpu.memory_space<vmem>>, vector<16x128xf32>
      tpu.vector_store %arg15[%c0_21, %c0_22], %32 {strides = array<i32>} : memref<16x128xf32, #tpu.memory_space<vmem>>, vector<16x128xf32>,
    } else {
    }
    %c16_i32 = arith.constant 16 : i32
    %8 = arith.muli %arg1, %c16_i32 : i32
    %9 = tpu.assume_multiple %8, 16 : i32
    %10 = arith.index_cast %9 : i32 to index
    %c0 = arith.constant 0 : index
    %11 = vector.load %arg14[%10, %c0] : memref<16x128xbf16, #tpu.memory_space<vmem>>, vector<16x128xbf16>
    %c0_4 = arith.constant 0 : index
    %c0_5 = arith.constant 0 : index
    %c0_6 = arith.constant 0 : index
    %12 = vector.load %arg5[%c0_4, %c0_5, %c0_6] : memref<1x128x128xbf16, #tpu.memory_space<vmem>>, vector<1x128x128xbf16>
    %13 = vector.shape_cast %12 : vector<1x128x128xbf16> to vector<128x128xbf16>
    %cst = arith.constant dense<0.000000e+00> : vector<16x128xf32>
    %14 = tpu.matmul %11, %13, %cst {dimension_numbers = #tpu.dot_dimension_numbers<[1], [0], [0], [1], [0, 0, 1, 1], [], []>} : vector<16x128xbf16>, vector<128x128xbf16>, vector<16x128xf32> -> vector<16x128xf32>
    %c0_7 = arith.constant 0 : index
    %c0_8 = arith.constant 0 : index
    %15 = vector.load %arg15[%c0_7, %c0_8] : memref<16x128xf32, #tpu.memory_space<vmem>>, vector<16x128xf32>
    %c0_9 = arith.constant 0 : index
    %c0_10 = arith.constant 0 : index
    %c0_11 = arith.constant 0 : index
    %16 = vector.load %arg4[%c0_9, %c0_10, %c0_11] : memref<1x16x16xbf16, #tpu.memory_space<vmem>>, vector<1x16x16xbf16>
    %17 = vector.shape_cast %16 : vector<1x16x16xbf16> to vector<16x16xbf16>
    %18 = arith.truncf %14 : vector<16x128xf32> to vector<16x128xbf16>
    %cst_12 = arith.constant dense<0.000000e+00> : vector<16x128xf32>
    %19 = tpu.matmul %17, %18, %cst_12 {dimension_numbers = #tpu.dot_dimension_numbers<[1], [0], [0], [1], [0, 0, 1, 1], [], []>} : vector<16x16xbf16>, vector<16x128xbf16>, vector<16x128xf32> -> vector<16x128xf32>
    %20 = arith.addf %15, %19 : vector<16x128xf32>
    %c0_13 = arith.constant 0 : index
    %c0_14 = arith.constant 0 : index
    %21 = vector.load %arg15[%c0_13, %c0_14] : memref<16x128xf32, #tpu.memory_space<vmem>>, vector<16x128xf32>
    tpu.vector_store %arg15[%c0_13, %c0_14], %20 {strides = array<i32>} : memref<16x128xf32, #tpu.memory_space<vmem>>, vector<16x128xf32>,
    %c0_i32_15 = arith.constant 0 : i32
    %22 = arith.cmpi eq, %arg1, %c0_i32_15 : i32
    %c2_i32 = arith.constant 2 : i32
    %23 = arith.cmpi slt, %arg0, %c2_i32 : i32
    %24 = arith.andi %22, %23 : i1
    %25 = arith.extui %24 : i1 to i32
    %c0_i32_16 = arith.constant 0 : i32
    %26 = arith.cmpi ne, %25, %c0_i32_16 : i32
    scf.if %26 {
      %c0_20 = arith.constant 0 : index
      %c0_21 = arith.constant 0 : index
      %32 = vector.load %arg15[%c0_20, %c0_21] : memref<16x128xf32, #tpu.memory_space<vmem>>, vector<16x128xf32>
      %c0_22 = arith.constant 0 : index
      %c0_23 = arith.constant 0 : index
      %c0_24 = arith.constant 0 : index
      %33 = vector.load %arg6[%c0_22, %c0_23, %c0_24] : memref<1x1x128xf32, #tpu.memory_space<vmem>>, vector<1x1x128xf32>
      %34 = vector.shape_cast %33 : vector<1x1x128xf32> to vector<1x128xf32>
      %35 = vector.broadcast %34 : vector<1x128xf32> to vector<16x128xf32>
      %36 = arith.addf %32, %35 : vector<16x128xf32>
      %cst_25 = arith.constant 0.000000e+00 : f32
      %37 = vector.broadcast %cst_25 : f32 to vector<16x128xf32>
      %38 = arith.maximumf %36, %37 : vector<16x128xf32>
      %39 = arith.truncf %38 : vector<16x128xf32> to vector<16x128xbf16>
      %c0_26 = arith.constant 0 : index
      %c0_27 = arith.constant 0 : index
      %40 = vector.load %arg14[%c0_26, %c0_27] : memref<16x128xbf16, #tpu.memory_space<vmem>>, vector<16x128xbf16>
      tpu.vector_store %arg14[%c0_26, %c0_27], %39 {strides = array<i32>} : memref<16x128xbf16, #tpu.memory_space<vmem>>, vector<16x128xbf16>,
    } else {
    }
    %c0_i32_17 = arith.constant 0 : i32
    %27 = arith.cmpi eq, %arg1, %c0_i32_17 : i32
    %c2_i32_18 = arith.constant 2 : i32
    %28 = arith.cmpi eq, %arg0, %c2_i32_18 : i32
    %29 = arith.andi %27, %28 : i1
    %30 = arith.extui %29 : i1 to i32
    %c0_i32_19 = arith.constant 0 : i32
    %31 = arith.cmpi ne, %30, %c0_i32_19 : i32
    scf.if %31 {
      %c0_20 = arith.constant 0 : index
      %c0_21 = arith.constant 0 : index
      %32 = vector.load %arg15[%c0_20, %c0_21] : memref<16x128xf32, #tpu.memory_space<vmem>>, vector<16x128xf32>
      %c0_22 = arith.constant 0 : index
      %c0_23 = arith.constant 0 : index
      %c0_24 = arith.constant 0 : index
      %33 = vector.load %arg6[%c0_22, %c0_23, %c0_24] : memref<1x1x128xf32, #tpu.memory_space<vmem>>, vector<1x1x128xf32>
      %34 = vector.shape_cast %33 : vector<1x1x128xf32> to vector<1x128xf32>
      %35 = vector.broadcast %34 : vector<1x128xf32> to vector<16x128xf32>
      %36 = arith.addf %32, %35 : vector<16x128xf32>
      %c0_25 = arith.constant 0 : index
      %c0_26 = arith.constant 0 : index
      %37 = vector.load %arg15[%c0_25, %c0_26] : memref<16x128xf32, #tpu.memory_space<vmem>>, vector<16x128xf32>
      tpu.vector_store %arg15[%c0_25, %c0_26], %36 {strides = array<i32>} : memref<16x128xf32, #tpu.memory_space<vmem>>, vector<16x128xf32>,
      %c0_i32_27 = arith.constant 0 : i32
      %c0_28 = arith.constant 0 : index
      %38 = arith.index_cast %c0_i32_27 : i32 to index
      %39 = memref.load %arg2[%c0_28, %38] : memref<2x16xi32, #tpu.memory_space<smem>>
      %c1 = arith.constant 1 : index
      %40 = arith.index_cast %c0_i32_27 : i32 to index
      %41 = memref.load %arg2[%c1, %40] : memref<2x16xi32, #tpu.memory_space<smem>>
      %42 = arith.index_cast %39 : i32 to index
      %c0_29 = arith.constant 0 : index
      %43 = vector.load %arg15[%42, %c0_29] : memref<16x128xf32, #tpu.memory_space<vmem>>, vector<1x128xf32>
      %44 = arith.index_cast %41 : i32 to index
      %c0_30 = arith.constant 0 : index
      %45 = vector.load %arg15[%44, %c0_30] : memref<16x128xf32, #tpu.memory_space<vmem>>, vector<1x128xf32>
      %46 = arith.mulf %43, %45 : vector<1x128xf32>
      %47 = arith.index_cast %c0_i32_27 : i32 to index
      %c0_31 = arith.constant 0 : index
      %48 = vector.load %arg16[%47, %c0_31] : memref<16x128xf32, #tpu.memory_space<vmem>>, vector<1x128xf32>
      tpu.vector_store %arg16[%47, %c0_31], %46 {strides = array<i32>} : memref<16x128xf32, #tpu.memory_space<vmem>>, vector<1x128xf32>,
      %c1_i32 = arith.constant 1 : i32
      %c0_32 = arith.constant 0 : index
      %49 = arith.index_cast %c1_i32 : i32 to index
      %50 = memref.load %arg2[%c0_32, %49] : memref<2x16xi32, #tpu.memory_space<smem>>
      %c1_33 = arith.constant 1 : index
      %51 = arith.index_cast %c1_i32 : i32 to index
      %52 = memref.load %arg2[%c1_33, %51] : memref<2x16xi32, #tpu.memory_space<smem>>
      %53 = arith.index_cast %50 : i32 to index
      %c0_34 = arith.constant 0 : index
      %54 = vector.load %arg15[%53, %c0_34] : memref<16x128xf32, #tpu.memory_space<vmem>>, vector<1x128xf32>
      %55 = arith.index_cast %52 : i32 to index
      %c0_35 = arith.constant 0 : index
      %56 = vector.load %arg15[%55, %c0_35] : memref<16x128xf32, #tpu.memory_space<vmem>>, vector<1x128xf32>
      %57 = arith.mulf %54, %56 : vector<1x128xf32>
      %58 = arith.index_cast %c1_i32 : i32 to index
      %c0_36 = arith.constant 0 : index
      %59 = vector.load %arg16[%58, %c0_36] : memref<16x128xf32, #tpu.memory_space<vmem>>, vector<1x128xf32>
      tpu.vector_store %arg16[%58, %c0_36], %57 {strides = array<i32>} : memref<16x128xf32, #tpu.memory_space<vmem>>, vector<1x128xf32>,
      %c2_i32_37 = arith.constant 2 : i32
      %c0_38 = arith.constant 0 : index
      %60 = arith.index_cast %c2_i32_37 : i32 to index
      %61 = memref.load %arg2[%c0_38, %60] : memref<2x16xi32, #tpu.memory_space<smem>>
      %c1_39 = arith.constant 1 : index
      %62 = arith.index_cast %c2_i32_37 : i32 to index
      %63 = memref.load %arg2[%c1_39, %62] : memref<2x16xi32, #tpu.memory_space<smem>>
      %64 = arith.index_cast %61 : i32 to index
      %c0_40 = arith.constant 0 : index
      %65 = vector.load %arg15[%64, %c0_40] : memref<16x128xf32, #tpu.memory_space<vmem>>, vector<1x128xf32>
      %66 = arith.index_cast %63 : i32 to index
      %c0_41 = arith.constant 0 : index
      %67 = vector.load %arg15[%66, %c0_41] : memref<16x128xf32, #tpu.memory_space<vmem>>, vector<1x128xf32>
      %68 = arith.mulf %65, %67 : vector<1x128xf32>
      %69 = arith.index_cast %c2_i32_37 : i32 to index
      %c0_42 = arith.constant 0 : index
      %70 = vector.load %arg16[%69, %c0_42] : memref<16x128xf32, #tpu.memory_space<vmem>>, vector<1x128xf32>
      tpu.vector_store %arg16[%69, %c0_42], %68 {strides = array<i32>} : memref<16x128xf32, #tpu.memory_space<vmem>>, vector<1x128xf32>,
      %c3_i32 = arith.constant 3 : i32
      %c0_43 = arith.constant 0 : index
      %71 = arith.index_cast %c3_i32 : i32 to index
      %72 = memref.load %arg2[%c0_43, %71] : memref<2x16xi32, #tpu.memory_space<smem>>
      %c1_44 = arith.constant 1 : index
      %73 = arith.index_cast %c3_i32 : i32 to index
      %74 = memref.load %arg2[%c1_44, %73] : memref<2x16xi32, #tpu.memory_space<smem>>
      %75 = arith.index_cast %72 : i32 to index
      %c0_45 = arith.constant 0 : index
      %76 = vector.load %arg15[%75, %c0_45] : memref<16x128xf32, #tpu.memory_space<vmem>>, vector<1x128xf32>
      %77 = arith.index_cast %74 : i32 to index
      %c0_46 = arith.constant 0 : index
      %78 = vector.load %arg15[%77, %c0_46] : memref<16x128xf32, #tpu.memory_space<vmem>>, vector<1x128xf32>
      %79 = arith.mulf %76, %78 : vector<1x128xf32>
      %80 = arith.index_cast %c3_i32 : i32 to index
      %c0_47 = arith.constant 0 : index
      %81 = vector.load %arg16[%80, %c0_47] : memref<16x128xf32, #tpu.memory_space<vmem>>, vector<1x128xf32>
      tpu.vector_store %arg16[%80, %c0_47], %79 {strides = array<i32>} : memref<16x128xf32, #tpu.memory_space<vmem>>, vector<1x128xf32>,
      %c4_i32 = arith.constant 4 : i32
      %c0_48 = arith.constant 0 : index
      %82 = arith.index_cast %c4_i32 : i32 to index
      %83 = memref.load %arg2[%c0_48, %82] : memref<2x16xi32, #tpu.memory_space<smem>>
      %c1_49 = arith.constant 1 : index
      %84 = arith.index_cast %c4_i32 : i32 to index
      %85 = memref.load %arg2[%c1_49, %84] : memref<2x16xi32, #tpu.memory_space<smem>>
      %86 = arith.index_cast %83 : i32 to index
      %c0_50 = arith.constant 0 : index
      %87 = vector.load %arg15[%86, %c0_50] : memref<16x128xf32, #tpu.memory_space<vmem>>, vector<1x128xf32>
      %88 = arith.index_cast %85 : i32 to index
      %c0_51 = arith.constant 0 : index
      %89 = vector.load %arg15[%88, %c0_51] : memref<16x128xf32, #tpu.memory_space<vmem>>, vector<1x128xf32>
      %90 = arith.mulf %87, %89 : vector<1x128xf32>
      %91 = arith.index_cast %c4_i32 : i32 to index
      %c0_52 = arith.constant 0 : index
      %92 = vector.load %arg16[%91, %c0_52] : memref<16x128xf32, #tpu.memory_space<vmem>>, vector<1x128xf32>
      tpu.vector_store %arg16[%91, %c0_52], %90 {strides = array<i32>} : memref<16x128xf32, #tpu.memory_space<vmem>>, vector<1x128xf32>,
      %c5_i32 = arith.constant 5 : i32
      %c0_53 = arith.constant 0 : index
      %93 = arith.index_cast %c5_i32 : i32 to index
      %94 = memref.load %arg2[%c0_53, %93] : memref<2x16xi32, #tpu.memory_space<smem>>
      %c1_54 = arith.constant 1 : index
      %95 = arith.index_cast %c5_i32 : i32 to index
      %96 = memref.load %arg2[%c1_54, %95] : memref<2x16xi32, #tpu.memory_space<smem>>
      %97 = arith.index_cast %94 : i32 to index
      %c0_55 = arith.constant 0 : index
      %98 = vector.load %arg15[%97, %c0_55] : memref<16x128xf32, #tpu.memory_space<vmem>>, vector<1x128xf32>
      %99 = arith.index_cast %96 : i32 to index
      %c0_56 = arith.constant 0 : index
      %100 = vector.load %arg15[%99, %c0_56] : memref<16x128xf32, #tpu.memory_space<vmem>>, vector<1x128xf32>
      %101 = arith.mulf %98, %100 : vector<1x128xf32>
      %102 = arith.index_cast %c5_i32 : i32 to index
      %c0_57 = arith.constant 0 : index
      %103 = vector.load %arg16[%102, %c0_57] : memref<16x128xf32, #tpu.memory_space<vmem>>, vector<1x128xf32>
      tpu.vector_store %arg16[%102, %c0_57], %101 {strides = array<i32>} : memref<16x128xf32, #tpu.memory_space<vmem>>, vector<1x128xf32>,
      %c6_i32 = arith.constant 6 : i32
      %c0_58 = arith.constant 0 : index
      %104 = arith.index_cast %c6_i32 : i32 to index
      %105 = memref.load %arg2[%c0_58, %104] : memref<2x16xi32, #tpu.memory_space<smem>>
      %c1_59 = arith.constant 1 : index
      %106 = arith.index_cast %c6_i32 : i32 to index
      %107 = memref.load %arg2[%c1_59, %106] : memref<2x16xi32, #tpu.memory_space<smem>>
      %108 = arith.index_cast %105 : i32 to index
      %c0_60 = arith.constant 0 : index
      %109 = vector.load %arg15[%108, %c0_60] : memref<16x128xf32, #tpu.memory_space<vmem>>, vector<1x128xf32>
      %110 = arith.index_cast %107 : i32 to index
      %c0_61 = arith.constant 0 : index
      %111 = vector.load %arg15[%110, %c0_61] : memref<16x128xf32, #tpu.memory_space<vmem>>, vector<1x128xf32>
      %112 = arith.mulf %109, %111 : vector<1x128xf32>
      %113 = arith.index_cast %c6_i32 : i32 to index
      %c0_62 = arith.constant 0 : index
      %114 = vector.load %arg16[%113, %c0_62] : memref<16x128xf32, #tpu.memory_space<vmem>>, vector<1x128xf32>
      tpu.vector_store %arg16[%113, %c0_62], %112 {strides = array<i32>} : memref<16x128xf32, #tpu.memory_space<vmem>>, vector<1x128xf32>,
      %c7_i32 = arith.constant 7 : i32
      %c0_63 = arith.constant 0 : index
      %115 = arith.index_cast %c7_i32 : i32 to index
      %116 = memref.load %arg2[%c0_63, %115] : memref<2x16xi32, #tpu.memory_space<smem>>
      %c1_64 = arith.constant 1 : index
      %117 = arith.index_cast %c7_i32 : i32 to index
      %118 = memref.load %arg2[%c1_64, %117] : memref<2x16xi32, #tpu.memory_space<smem>>
      %119 = arith.index_cast %116 : i32 to index
      %c0_65 = arith.constant 0 : index
      %120 = vector.load %arg15[%119, %c0_65] : memref<16x128xf32, #tpu.memory_space<vmem>>, vector<1x128xf32>
      %121 = arith.index_cast %118 : i32 to index
      %c0_66 = arith.constant 0 : index
      %122 = vector.load %arg15[%121, %c0_66] : memref<16x128xf32, #tpu.memory_space<vmem>>, vector<1x128xf32>
      %123 = arith.mulf %120, %122 : vector<1x128xf32>
      %124 = arith.index_cast %c7_i32 : i32 to index
      %c0_67 = arith.constant 0 : index
      %125 = vector.load %arg16[%124, %c0_67] : memref<16x128xf32, #tpu.memory_space<vmem>>, vector<1x128xf32>
      tpu.vector_store %arg16[%124, %c0_67], %123 {strides = array<i32>} : memref<16x128xf32, #tpu.memory_space<vmem>>, vector<1x128xf32>,
      %c8_i32 = arith.constant 8 : i32
      %c0_68 = arith.constant 0 : index
      %126 = arith.index_cast %c8_i32 : i32 to index
      %127 = memref.load %arg2[%c0_68, %126] : memref<2x16xi32, #tpu.memory_space<smem>>
      %c1_69 = arith.constant 1 : index
      %128 = arith.index_cast %c8_i32 : i32 to index
      %129 = memref.load %arg2[%c1_69, %128] : memref<2x16xi32, #tpu.memory_space<smem>>
      %130 = arith.index_cast %127 : i32 to index
      %c0_70 = arith.constant 0 : index
      %131 = vector.load %arg15[%130, %c0_70] : memref<16x128xf32, #tpu.memory_space<vmem>>, vector<1x128xf32>
      %132 = arith.index_cast %129 : i32 to index
      %c0_71 = arith.constant 0 : index
      %133 = vector.load %arg15[%132, %c0_71] : memref<16x128xf32, #tpu.memory_space<vmem>>, vector<1x128xf32>
      %134 = arith.mulf %131, %133 : vector<1x128xf32>
      %135 = arith.index_cast %c8_i32 : i32 to index
      %c0_72 = arith.constant 0 : index
      %136 = vector.load %arg16[%135, %c0_72] : memref<16x128xf32, #tpu.memory_space<vmem>>, vector<1x128xf32>
      tpu.vector_store %arg16[%135, %c0_72], %134 {strides = array<i32>} : memref<16x128xf32, #tpu.memory_space<vmem>>, vector<1x128xf32>,
      %c9_i32 = arith.constant 9 : i32
      %c0_73 = arith.constant 0 : index
      %137 = arith.index_cast %c9_i32 : i32 to index
      %138 = memref.load %arg2[%c0_73, %137] : memref<2x16xi32, #tpu.memory_space<smem>>
      %c1_74 = arith.constant 1 : index
      %139 = arith.index_cast %c9_i32 : i32 to index
      %140 = memref.load %arg2[%c1_74, %139] : memref<2x16xi32, #tpu.memory_space<smem>>
      %141 = arith.index_cast %138 : i32 to index
      %c0_75 = arith.constant 0 : index
      %142 = vector.load %arg15[%141, %c0_75] : memref<16x128xf32, #tpu.memory_space<vmem>>, vector<1x128xf32>
      %143 = arith.index_cast %140 : i32 to index
      %c0_76 = arith.constant 0 : index
      %144 = vector.load %arg15[%143, %c0_76] : memref<16x128xf32, #tpu.memory_space<vmem>>, vector<1x128xf32>
      %145 = arith.mulf %142, %144 : vector<1x128xf32>
      %146 = arith.index_cast %c9_i32 : i32 to index
      %c0_77 = arith.constant 0 : index
      %147 = vector.load %arg16[%146, %c0_77] : memref<16x128xf32, #tpu.memory_space<vmem>>, vector<1x128xf32>
      tpu.vector_store %arg16[%146, %c0_77], %145 {strides = array<i32>} : memref<16x128xf32, #tpu.memory_space<vmem>>, vector<1x128xf32>,
      %c10_i32 = arith.constant 10 : i32
      %c0_78 = arith.constant 0 : index
      %148 = arith.index_cast %c10_i32 : i32 to index
      %149 = memref.load %arg2[%c0_78, %148] : memref<2x16xi32, #tpu.memory_space<smem>>
      %c1_79 = arith.constant 1 : index
      %150 = arith.index_cast %c10_i32 : i32 to index
      %151 = memref.load %arg2[%c1_79, %150] : memref<2x16xi32, #tpu.memory_space<smem>>
      %152 = arith.index_cast %149 : i32 to index
      %c0_80 = arith.constant 0 : index
      %153 = vector.load %arg15[%152, %c0_80] : memref<16x128xf32, #tpu.memory_space<vmem>>, vector<1x128xf32>
      %154 = arith.index_cast %151 : i32 to index
      %c0_81 = arith.constant 0 : index
      %155 = vector.load %arg15[%154, %c0_81] : memref<16x128xf32, #tpu.memory_space<vmem>>, vector<1x128xf32>
      %156 = arith.mulf %153, %155 : vector<1x128xf32>
      %157 = arith.index_cast %c10_i32 : i32 to index
      %c0_82 = arith.constant 0 : index
      %158 = vector.load %arg16[%157, %c0_82] : memref<16x128xf32, #tpu.memory_space<vmem>>, vector<1x128xf32>
      tpu.vector_store %arg16[%157, %c0_82], %156 {strides = array<i32>} : memref<16x128xf32, #tpu.memory_space<vmem>>, vector<1x128xf32>,
      %c11_i32 = arith.constant 11 : i32
      %c0_83 = arith.constant 0 : index
      %159 = arith.index_cast %c11_i32 : i32 to index
      %160 = memref.load %arg2[%c0_83, %159] : memref<2x16xi32, #tpu.memory_space<smem>>
      %c1_84 = arith.constant 1 : index
      %161 = arith.index_cast %c11_i32 : i32 to index
      %162 = memref.load %arg2[%c1_84, %161] : memref<2x16xi32, #tpu.memory_space<smem>>
      %163 = arith.index_cast %160 : i32 to index
      %c0_85 = arith.constant 0 : index
      %164 = vector.load %arg15[%163, %c0_85] : memref<16x128xf32, #tpu.memory_space<vmem>>, vector<1x128xf32>
      %165 = arith.index_cast %162 : i32 to index
      %c0_86 = arith.constant 0 : index
      %166 = vector.load %arg15[%165, %c0_86] : memref<16x128xf32, #tpu.memory_space<vmem>>, vector<1x128xf32>
      %167 = arith.mulf %164, %166 : vector<1x128xf32>
      %168 = arith.index_cast %c11_i32 : i32 to index
      %c0_87 = arith.constant 0 : index
      %169 = vector.load %arg16[%168, %c0_87] : memref<16x128xf32, #tpu.memory_space<vmem>>, vector<1x128xf32>
      tpu.vector_store %arg16[%168, %c0_87], %167 {strides = array<i32>} : memref<16x128xf32, #tpu.memory_space<vmem>>, vector<1x128xf32>,
      %c12_i32 = arith.constant 12 : i32
      %c0_88 = arith.constant 0 : index
      %170 = arith.index_cast %c12_i32 : i32 to index
      %171 = memref.load %arg2[%c0_88, %170] : memref<2x16xi32, #tpu.memory_space<smem>>
      %c1_89 = arith.constant 1 : index
      %172 = arith.index_cast %c12_i32 : i32 to index
      %173 = memref.load %arg2[%c1_89, %172] : memref<2x16xi32, #tpu.memory_space<smem>>
      %174 = arith.index_cast %171 : i32 to index
      %c0_90 = arith.constant 0 : index
      %175 = vector.load %arg15[%174, %c0_90] : memref<16x128xf32, #tpu.memory_space<vmem>>, vector<1x128xf32>
      %176 = arith.index_cast %173 : i32 to index
      %c0_91 = arith.constant 0 : index
      %177 = vector.load %arg15[%176, %c0_91] : memref<16x128xf32, #tpu.memory_space<vmem>>, vector<1x128xf32>
      %178 = arith.mulf %175, %177 : vector<1x128xf32>
      %179 = arith.index_cast %c12_i32 : i32 to index
      %c0_92 = arith.constant 0 : index
      %180 = vector.load %arg16[%179, %c0_92] : memref<16x128xf32, #tpu.memory_space<vmem>>, vector<1x128xf32>
      tpu.vector_store %arg16[%179, %c0_92], %178 {strides = array<i32>} : memref<16x128xf32, #tpu.memory_space<vmem>>, vector<1x128xf32>,
      %c13_i32 = arith.constant 13 : i32
      %c0_93 = arith.constant 0 : index
      %181 = arith.index_cast %c13_i32 : i32 to index
      %182 = memref.load %arg2[%c0_93, %181] : memref<2x16xi32, #tpu.memory_space<smem>>
      %c1_94 = arith.constant 1 : index
      %183 = arith.index_cast %c13_i32 : i32 to index
      %184 = memref.load %arg2[%c1_94, %183] : memref<2x16xi32, #tpu.memory_space<smem>>
      %185 = arith.index_cast %182 : i32 to index
      %c0_95 = arith.constant 0 : index
      %186 = vector.load %arg15[%185, %c0_95] : memref<16x128xf32, #tpu.memory_space<vmem>>, vector<1x128xf32>
      %187 = arith.index_cast %184 : i32 to index
      %c0_96 = arith.constant 0 : index
      %188 = vector.load %arg15[%187, %c0_96] : memref<16x128xf32, #tpu.memory_space<vmem>>, vector<1x128xf32>
      %189 = arith.mulf %186, %188 : vector<1x128xf32>
      %190 = arith.index_cast %c13_i32 : i32 to index
      %c0_97 = arith.constant 0 : index
      %191 = vector.load %arg16[%190, %c0_97] : memref<16x128xf32, #tpu.memory_space<vmem>>, vector<1x128xf32>
      tpu.vector_store %arg16[%190, %c0_97], %189 {strides = array<i32>} : memref<16x128xf32, #tpu.memory_space<vmem>>, vector<1x128xf32>,
      %c14_i32 = arith.constant 14 : i32
      %c0_98 = arith.constant 0 : index
      %192 = arith.index_cast %c14_i32 : i32 to index
      %193 = memref.load %arg2[%c0_98, %192] : memref<2x16xi32, #tpu.memory_space<smem>>
      %c1_99 = arith.constant 1 : index
      %194 = arith.index_cast %c14_i32 : i32 to index
      %195 = memref.load %arg2[%c1_99, %194] : memref<2x16xi32, #tpu.memory_space<smem>>
      %196 = arith.index_cast %193 : i32 to index
      %c0_100 = arith.constant 0 : index
      %197 = vector.load %arg15[%196, %c0_100] : memref<16x128xf32, #tpu.memory_space<vmem>>, vector<1x128xf32>
      %198 = arith.index_cast %195 : i32 to index
      %c0_101 = arith.constant 0 : index
      %199 = vector.load %arg15[%198, %c0_101] : memref<16x128xf32, #tpu.memory_space<vmem>>, vector<1x128xf32>
      %200 = arith.mulf %197, %199 : vector<1x128xf32>
      %201 = arith.index_cast %c14_i32 : i32 to index
      %c0_102 = arith.constant 0 : index
      %202 = vector.load %arg16[%201, %c0_102] : memref<16x128xf32, #tpu.memory_space<vmem>>, vector<1x128xf32>
      tpu.vector_store %arg16[%201, %c0_102], %200 {strides = array<i32>} : memref<16x128xf32, #tpu.memory_space<vmem>>, vector<1x128xf32>,
      %c15_i32 = arith.constant 15 : i32
      %c0_103 = arith.constant 0 : index
      %203 = arith.index_cast %c15_i32 : i32 to index
      %204 = memref.load %arg2[%c0_103, %203] : memref<2x16xi32, #tpu.memory_space<smem>>
      %c1_104 = arith.constant 1 : index
      %205 = arith.index_cast %c15_i32 : i32 to index
      %206 = memref.load %arg2[%c1_104, %205] : memref<2x16xi32, #tpu.memory_space<smem>>
      %207 = arith.index_cast %204 : i32 to index
      %c0_105 = arith.constant 0 : index
      %208 = vector.load %arg15[%207, %c0_105] : memref<16x128xf32, #tpu.memory_space<vmem>>, vector<1x128xf32>
      %209 = arith.index_cast %206 : i32 to index
      %c0_106 = arith.constant 0 : index
      %210 = vector.load %arg15[%209, %c0_106] : memref<16x128xf32, #tpu.memory_space<vmem>>, vector<1x128xf32>
      %211 = arith.mulf %208, %210 : vector<1x128xf32>
      %212 = arith.index_cast %c15_i32 : i32 to index
      %c0_107 = arith.constant 0 : index
      %213 = vector.load %arg16[%212, %c0_107] : memref<16x128xf32, #tpu.memory_space<vmem>>, vector<1x128xf32>
      tpu.vector_store %arg16[%212, %c0_107], %211 {strides = array<i32>} : memref<16x128xf32, #tpu.memory_space<vmem>>, vector<1x128xf32>,
      %c16_i32_108 = arith.constant 16 : i32
      %c0_109 = arith.constant 0 : index
      %c0_110 = arith.constant 0 : index
      %214 = vector.load %arg16[%c0_109, %c0_110] : memref<16x128xf32, #tpu.memory_space<vmem>>, vector<16x128xf32>
      %215 = arith.truncf %214 : vector<16x128xf32> to vector<16x128xbf16>
      %c0_111 = arith.constant 0 : index
      %c0_112 = arith.constant 0 : index
      %216 = vector.load %arg7[%c0_111, %c0_112] : memref<128x128xbf16, #tpu.memory_space<vmem>>, vector<128x128xbf16>
      %cst_113 = arith.constant dense<0.000000e+00> : vector<16x128xf32>
      %217 = tpu.matmul %215, %216, %cst_113 {dimension_numbers = #tpu.dot_dimension_numbers<[1], [0], [0], [1], [0, 0, 1, 1], [], []>} : vector<16x128xbf16>, vector<128x128xbf16>, vector<16x128xf32> -> vector<16x128xf32>
      %c0_114 = arith.constant 0 : index
      %c0_115 = arith.constant 0 : index
      %218 = vector.load %arg10[%c0_114, %c0_115] : memref<1x128xf32, #tpu.memory_space<vmem>>, vector<1x128xf32>
      %219 = vector.broadcast %218 : vector<1x128xf32> to vector<16x128xf32>
      %220 = arith.addf %217, %219 : vector<16x128xf32>
      %cst_116 = arith.constant 0.000000e+00 : f32
      %221 = vector.broadcast %cst_116 : f32 to vector<16x128xf32>
      %222 = arith.maximumf %220, %221 : vector<16x128xf32>
      %223 = arith.truncf %222 : vector<16x128xf32> to vector<16x128xbf16>
      %c0_117 = arith.constant 0 : index
      %c0_118 = arith.constant 0 : index
      %224 = vector.load %arg8[%c0_117, %c0_118] : memref<128x128xbf16, #tpu.memory_space<vmem>>, vector<128x128xbf16>
      %cst_119 = arith.constant dense<0.000000e+00> : vector<16x128xf32>
      %225 = tpu.matmul %223, %224, %cst_119 {dimension_numbers = #tpu.dot_dimension_numbers<[1], [0], [0], [1], [0, 0, 1, 1], [], []>} : vector<16x128xbf16>, vector<128x128xbf16>, vector<16x128xf32> -> vector<16x128xf32>
      %c0_120 = arith.constant 0 : index
      %c0_121 = arith.constant 0 : index
      %226 = vector.load %arg11[%c0_120, %c0_121] : memref<1x128xf32, #tpu.memory_space<vmem>>, vector<1x128xf32>
      %227 = vector.broadcast %226 : vector<1x128xf32> to vector<16x128xf32>
      %228 = arith.addf %225, %227 : vector<16x128xf32>
      %cst_122 = arith.constant 0.000000e+00 : f32
      %229 = vector.broadcast %cst_122 : f32 to vector<16x128xf32>
      %230 = arith.maximumf %228, %229 : vector<16x128xf32>
      %231 = arith.truncf %230 : vector<16x128xf32> to vector<16x128xbf16>
      %c0_123 = arith.constant 0 : index
      %c0_124 = arith.constant 0 : index
      %232 = vector.load %arg9[%c0_123, %c0_124] : memref<128x128xbf16, #tpu.memory_space<vmem>>, vector<128x128xbf16>
      %cst_125 = arith.constant dense<0.000000e+00> : vector<16x128xf32>
      %233 = tpu.matmul %231, %232, %cst_125 {dimension_numbers = #tpu.dot_dimension_numbers<[1], [0], [0], [1], [0, 0, 1, 1], [], []>} : vector<16x128xbf16>, vector<128x128xbf16>, vector<16x128xf32> -> vector<16x128xf32>
      %c0_126 = arith.constant 0 : index
      %c0_127 = arith.constant 0 : index
      %234 = vector.load %arg12[%c0_126, %c0_127] : memref<1x128xf32, #tpu.memory_space<vmem>>, vector<1x128xf32>
      %235 = vector.broadcast %234 : vector<1x128xf32> to vector<16x128xf32>
      %236 = arith.addf %233, %235 : vector<16x128xf32>
      %237 = arith.truncf %236 : vector<16x128xf32> to vector<16x128xbf16>
      %c0_128 = arith.constant 0 : index
      %c0_129 = arith.constant 0 : index
      %238 = vector.load %arg13[%c0_128, %c0_129] : memref<16x128xbf16, #tpu.memory_space<vmem>>, vector<16x128xbf16>
      tpu.vector_store %arg13[%c0_128, %c0_129], %237 {strides = array<i32>} : memref<16x128xbf16, #tpu.memory_space<vmem>>, vector<16x128xbf16>,
    } else {
    }
    return
  }
  func.func @transform_0(%arg0: i32, %arg1: i32, %arg2: memref<2x16xi32, #tpu.memory_space<smem>>) -> (i32, i32) {
    %c0_i32 = arith.constant 0 : i32
    %c0_i32_0 = arith.constant 0 : i32
    %c0_i32_1 = arith.constant 0 : i32
    return %c0_i32, %c0_i32_0 : i32, i32
  }
  func.func @transform_1(%arg0: i32, %arg1: i32, %arg2: memref<2x16xi32, #tpu.memory_space<smem>>) -> (i32, i32, i32) {
    %c0_i32 = arith.constant 0 : i32
    %c0_i32_0 = arith.constant 0 : i32
    return %arg0, %c0_i32, %arg1 : i32, i32, i32
  }
  func.func @transform_2(%arg0: i32, %arg1: i32, %arg2: memref<2x16xi32, #tpu.memory_space<smem>>) -> (i32, i32, i32) {
    %c0_i32 = arith.constant 0 : i32
    %c0_i32_0 = arith.constant 0 : i32
    %c0_i32_1 = arith.constant 0 : i32
    return %arg0, %c0_i32, %c0_i32_0 : i32, i32, i32
  }
  func.func @transform_3(%arg0: i32, %arg1: i32, %arg2: memref<2x16xi32, #tpu.memory_space<smem>>) -> (i32, i32, i32) {
    %c0_i32 = arith.constant 0 : i32
    %c0_i32_0 = arith.constant 0 : i32
    %c0_i32_1 = arith.constant 0 : i32
    return %arg0, %c0_i32, %c0_i32_0 : i32, i32, i32
  }
  func.func @transform_4(%arg0: i32, %arg1: i32, %arg2: memref<2x16xi32, #tpu.memory_space<smem>>) -> (i32, i32) {
    %c0_i32 = arith.constant 0 : i32
    %c0_i32_0 = arith.constant 0 : i32
    %c0_i32_1 = arith.constant 0 : i32
    return %c0_i32, %c0_i32_0 : i32, i32
  }
  func.func @transform_5(%arg0: i32, %arg1: i32, %arg2: memref<2x16xi32, #tpu.memory_space<smem>>) -> (i32, i32) {
    %c0_i32 = arith.constant 0 : i32
    %c0_i32_0 = arith.constant 0 : i32
    %c0_i32_1 = arith.constant 0 : i32
    return %c0_i32, %c0_i32_0 : i32, i32
  }
  func.func @transform_6(%arg0: i32, %arg1: i32, %arg2: memref<2x16xi32, #tpu.memory_space<smem>>) -> (i32, i32) {
    %c0_i32 = arith.constant 0 : i32
    %c0_i32_0 = arith.constant 0 : i32
    %c0_i32_1 = arith.constant 0 : i32
    return %c0_i32, %c0_i32_0 : i32, i32
  }
  func.func @transform_7(%arg0: i32, %arg1: i32, %arg2: memref<2x16xi32, #tpu.memory_space<smem>>) -> (i32, i32) {
    %c0_i32 = arith.constant 0 : i32
    %c0_i32_0 = arith.constant 0 : i32
    %c0_i32_1 = arith.constant 0 : i32
    return %c0_i32, %c0_i32_0 : i32, i32
  }
  func.func @transform_8(%arg0: i32, %arg1: i32, %arg2: memref<2x16xi32, #tpu.memory_space<smem>>) -> (i32, i32) {
    %c0_i32 = arith.constant 0 : i32
    %c0_i32_0 = arith.constant 0 : i32
    %c0_i32_1 = arith.constant 0 : i32
    return %c0_i32, %c0_i32_0 : i32, i32
  }
  func.func @transform_9(%arg0: i32, %arg1: i32, %arg2: memref<2x16xi32, #tpu.memory_space<smem>>) -> (i32, i32) {
    %c0_i32 = arith.constant 0 : i32
    %c0_i32_0 = arith.constant 0 : i32
    %c0_i32_1 = arith.constant 0 : i32
    return %c0_i32, %c0_i32_0 : i32, i32
  }
  func.func @transform_10(%arg0: i32, %arg1: i32, %arg2: memref<2x16xi32, #tpu.memory_space<smem>>) -> (i32, i32) {
    %c0_i32 = arith.constant 0 : i32
    %c0_i32_0 = arith.constant 0 : i32
    %c0_i32_1 = arith.constant 0 : i32
    return %c0_i32, %c0_i32_0 : i32, i32
  }
}

</mosaic_0001>

<llo_original>
// kernel: gcn_forward.1
$region0: #{gcn_forward.1}
  #allocation0 [shape = 'u32[]', space=smem, size = 0x4, offset = 0x4, fixed_abs, tag = 'smem constant byte address 0x4 - core index']
  #allocation1 [shape = 'u32[144,128]{1,0:T(1,128)}', space=vmem, size = 0x12000, scoped, tag = 'internal scratch']
  #allocation2 [shape = 'bf16[16,128]{1,0:T(16,128)(2,1)}', space=vmem, size = 0x1000, scoped, tag = 'scratch operand']
  #allocation3 [shape = 'f32[16,128]{1,0:T(8,128)}', space=vmem, size = 0x2000, scoped, tag = 'scratch operand']
  #allocation4 [shape = 'f32[16,128]{1,0:T(8,128)}', space=vmem, size = 0x2000, scoped, tag = 'scratch operand']
  #allocation5 [shape = 's32[1]{0}', space=sflag, size = 0x4, scoped, tag = 'scoped memory for gcn_forward.1']
  #allocation6 [shape = 'u8[1024]{0}', space=smem, size = 0x400, scoped, tag = 'prefetched SMEM operand 0']
  %s0 = inlined_call_operand.vmem [shape: s32[2,16], index: 0, kind: input, shape index: {}]
  %s1 = inlined_call_operand.vmem [shape: bf16[16,128], index: 1, kind: input, shape index: {}]
  %s2 = inlined_call_operand.vmem [shape: bf16[3,16,16], index: 2, kind: input, shape index: {}]
  %s3 = inlined_call_operand.vmem [shape: bf16[3,128,128], index: 3, kind: input, shape index: {}]
  %s4 = inlined_call_operand.vmem [shape: f32[3,1,128], index: 4, kind: input, shape index: {}]
  %s5 = inlined_call_operand.vmem [shape: bf16[128,128], index: 5, kind: input, shape index: {}]
  %s6 = inlined_call_operand.vmem [shape: bf16[128,128], index: 6, kind: input, shape index: {}]
  %s7 = inlined_call_operand.vmem [shape: bf16[128,128], index: 7, kind: input, shape index: {}]
  %s8 = inlined_call_operand.vmem [shape: f32[1,128], index: 8, kind: input, shape index: {}]
  %s9 = inlined_call_operand.vmem [shape: f32[1,128], index: 9, kind: input, shape index: {}]
  %s10 = inlined_call_operand.vmem [shape: f32[1,128], index: 10, kind: input, shape index: {}]
  %s11 = inlined_call_operand.vmem [shape: bf16[16,128], index: 11, kind: output, shape index: {}]
  %s12 = sld [smem:[#allocation0]]
  $region89: #{gcn_forward.1} parent=0
    _
  %s14 = ssub.s32 1, %s12
  %s15 = scalar_select 0, %s14, %s12
  %s16 = sshll.u32 %s0, 4
  %s17 = int_to_ptr.vmem [resolvable:$true] %s16
  %19 = dma.vmem_to_smem %s17, 32, [#allocation6], [#allocation5]
  %20 = dma.done [#allocation5], 32
  %21 = sfence
  loop: start=0, step=1, limit=5
  $region2: #{gcn_forward.1} parent=0 // loop_pre_header
    _
  $region3: #{gcn_forward.1} parent=0 // loop_header
    %s23 = sphi 0, %s27
    %p24 = scmp.ge.s32.totalorder %s23, 5
    %s30 = sphi 0, %s42
    %s31 = sphi 0, %s38
    %s32 = sphi 0, %s30
    %s33 = sphi 0, %s31
    %s34 = sphi 0, %s32
    %s35 = sphi 0, %s33
    %s43 = sphi 0, %s43
    %s45 = sphi 0, %s43
    %s46 = sphi 0, %s45
    %s60 = sphi 0, %s46
    %s68 = sphi 0, %s70
    %s71 = sphi 0, %s68
    %s72 = sphi 0, %s71
    %s88 = sphi 0, %s72
    %s94 = sphi 0, %s96
    %s97 = sphi 0, %s94
    %s98 = sphi 0, %s97
    %s114 = sphi 0, %s98
    %s120 = sphi 0, %s122
    %s123 = sphi 0, %s120
    %s124 = sphi 0, %s123
    %s140 = sphi 0, %s124
    %s144 = sphi 0, %s144
    %s146 = sphi 0, %s144
    %s147 = sphi 0, %s146
    %s161 = sphi 0, %s147
    %s165 = sphi 0, %s165
    %s167 = sphi 0, %s165
    %s168 = sphi 0, %s167
    %s182 = sphi 0, %s168
    %s186 = sphi 0, %s186
    %s188 = sphi 0, %s186
    %s189 = sphi 0, %s188
    %s203 = sphi 0, %s189
    %s207 = sphi 0, %s207
    %s209 = sphi 0, %s207
    %s210 = sphi 0, %s209
    %s224 = sphi 0, %s210
    %s228 = sphi 0, %s228
    %s230 = sphi 0, %s228
    %s231 = sphi 0, %s230
    %s245 = sphi 0, %s231
    %s249 = sphi 0, %s249
    %s251 = sphi 0, %s249
    %s252 = sphi 0, %s251
    %s266 = sphi 0, %s252
    %s270 = sphi 0, %s270
    %s272 = sphi 0, %s270
    %s273 = sphi 0, %s272
    %s287 = sphi 0, %s273
  $region4: #{gcn_forward.1} parent=0 // loop_header_branch
    %26 = sbr.rel (%p24) target = $region8
  $region5: #{gcn_forward.1} parent=0 // loop_body
    %s28 = ssub.s32 %s23, 1
    %s29 = ssub.s32 %s23, 2
    %s36 = sadd.s32 1, %s31
    %p37 = scmp.ge.s32.totalorder %s36, 1
    %s38 = scalar_select %p37, 0, %s36
    %s39 = sadd.s32 1, %s30
    %s40 = scalar_select %p37, %s39, %s30
    %p41 = scmp.ge.s32.totalorder %s40, 3
    %s42 = scalar_select %p41, 0, %s40
    %s44 = sadd.s32 %s43, 1
    %p47 = scmp.eq.s32.totalorder %s23, 2
    %p48 = scmp.ne.s32.totalorder %s43, %s45
    %p49 = scmp.eq.s32.totalorder %s23, 0
    %p50 = por %p48, %p49
    %p51 = scmp.ne.s32.totalorder %s43, %s45
    %p52 = scmp.eq.s32.totalorder %s28, 2
    %p53 = por %p51, %p52
    %p54 = scmp.ne.s32.totalorder %s45, %s46
    %p55 = scmp.eq.s32.totalorder %s28, 0
    %p56 = por %p54, %p55
    %p57 = scmp.ne.s32.totalorder %s45, %s46
    %p58 = scmp.eq.s32.totalorder %s29, 2
    %p59 = por %p57, %p58
    %p61 = scmp.ne.s32.totalorder %s46, %s60
    %p62 = scmp.eq.s32.totalorder %s29, 0
    %p63 = por %p61, %p62
    %s64 = ssub.s32 %s30, %s42
    %s65 = ssub.s32 %s31, %s38
    %s66 = sor.u32 %s64, %s65
    %p67 = scmp.eq.s32.totalorder %s66, 0
    %s69 = sadd.s32 %s68, 1
    %s70 = scalar_select %p67, %s68, %s69
    %p73 = pneg %p67
    %p74 = scmp.eq.s32.totalorder %s23, 2
    %p75 = por %p73, %p74
    %p76 = scmp.ne.s32.totalorder %s68, %s71
    %p77 = scmp.eq.s32.totalorder %s23, 0
    %p78 = por %p76, %p77
    %p79 = scmp.ne.s32.totalorder %s68, %s71
    %p80 = scmp.eq.s32.totalorder %s28, 2
    %p81 = por %p79, %p80
    %p82 = scmp.ne.s32.totalorder %s71, %s72
    %p83 = scmp.eq.s32.totalorder %s28, 0
    %p84 = por %p82, %p83
    %p85 = scmp.ne.s32.totalorder %s71, %s72
    %p86 = scmp.eq.s32.totalorder %s29, 2
    %p87 = por %p85, %p86
    %p89 = scmp.ne.s32.totalorder %s72, %s88
    %p90 = scmp.eq.s32.totalorder %s29, 0
    %p91 = por %p89, %p90
    %s92 = ssub.s32 %s30, %s42
    %p93 = scmp.eq.s32.totalorder %s92, 0
    %s95 = sadd.s32 %s94, 1
    %s96 = scalar_select %p93, %s94, %s95
    %p99 = pneg %p93
    %p100 = scmp.eq.s32.totalorder %s23, 2
    %p101 = por %p99, %p100
    %p102 = scmp.ne.s32.totalorder %s94, %s97
    %p103 = scmp.eq.s32.totalorder %s23, 0
    %p104 = por %p102, %p103
    %p105 = scmp.ne.s32.totalorder %s94, %s97
    %p106 = scmp.eq.s32.totalorder %s28, 2
    %p107 = por %p105, %p106
    %p108 = scmp.ne.s32.totalorder %s97, %s98
    %p109 = scmp.eq.s32.totalorder %s28, 0
    %p110 = por %p108, %p109
    %p111 = scmp.ne.s32.totalorder %s97, %s98
    %p112 = scmp.eq.s32.totalorder %s29, 2
    %p113 = por %p111, %p112
    %p115 = scmp.ne.s32.totalorder %s98, %s114
    %p116 = scmp.eq.s32.totalorder %s29, 0
    %p117 = por %p115, %p116
    %s118 = ssub.s32 %s30, %s42
    %p119 = scmp.eq.s32.totalorder %s118, 0
    %s121 = sadd.s32 %s120, 1
    %s122 = scalar_select %p119, %s120, %s121
    %p125 = pneg %p119
    %p126 = scmp.eq.s32.totalorder %s23, 2
    %p127 = por %p125, %p126
    %p128 = scmp.ne.s32.totalorder %s120, %s123
    %p129 = scmp.eq.s32.totalorder %s23, 0
    %p130 = por %p128, %p129
    %p131 = scmp.ne.s32.totalorder %s120, %s123
    %p132 = scmp.eq.s32.totalorder %s28, 2
    %p133 = por %p131, %p132
    %p134 = scmp.ne.s32.totalorder %s123, %s124
    %p135 = scmp.eq.s32.totalorder %s28, 0
    %p136 = por %p134, %p135
    %p137 = scmp.ne.s32.totalorder %s123, %s124
    %p138 = scmp.eq.s32.totalorder %s29, 2
    %p139 = por %p137, %p138
    %p141 = scmp.ne.s32.totalorder %s124, %s140
    %p142 = scmp.eq.s32.totalorder %s29, 0
    %p143 = por %p141, %p142
    %s145 = sadd.s32 %s144, 1
    %p148 = scmp.eq.s32.totalorder %s23, 2
    %p149 = scmp.ne.s32.totalorder %s144, %s146
    %p150 = scmp.eq.s32.totalorder %s23, 0
    %p151 = por %p149, %p150
    %p152 = scmp.ne.s32.totalorder %s144, %s146
    %p153 = scmp.eq.s32.totalorder %s28, 2
    %p154 = por %p152, %p153
    %p155 = scmp.ne.s32.totalorder %s146, %s147
    %p156 = scmp.eq.s32.totalorder %s28, 0
    %p157 = por %p155, %p156
    %p158 = scmp.ne.s32.totalorder %s146, %s147
    %p159 = scmp.eq.s32.totalorder %s29, 2
    %p160 = por %p158, %p159
    %p162 = scmp.ne.s32.totalorder %s147, %s161
    %p163 = scmp.eq.s32.totalorder %s29, 0
    %p164 = por %p162, %p163
    %s166 = sadd.s32 %s165, 1
    %p169 = scmp.eq.s32.totalorder %s23, 2
    %p170 = scmp.ne.s32.totalorder %s165, %s167
    %p171 = scmp.eq.s32.totalorder %s23, 0
    %p172 = por %p170, %p171
    %p173 = scmp.ne.s32.totalorder %s165, %s167
    %p174 = scmp.eq.s32.totalorder %s28, 2
    %p175 = por %p173, %p174
    %p176 = scmp.ne.s32.totalorder %s167, %s168
    %p177 = scmp.eq.s32.totalorder %s28, 0
    %p178 = por %p176, %p177
    %p179 = scmp.ne.s32.totalorder %s167, %s168
    %p180 = scmp.eq.s32.totalorder %s29, 2
    %p181 = por %p179, %p180
    %p183 = scmp.ne.s32.totalorder %s168, %s182
    %p184 = scmp.eq.s32.totalorder %s29, 0
    %p185 = por %p183, %p184
    %s187 = sadd.s32 %s186, 1
    %p190 = scmp.eq.s32.totalorder %s23, 2
    %p191 = scmp.ne.s32.totalorder %s186, %s188
    %p192 = scmp.eq.s32.totalorder %s23, 0
    %p193 = por %p191, %p192
    %p194 = scmp.ne.s32.totalorder %s186, %s188
    %p195 = scmp.eq.s32.totalorder %s28, 2
    %p196 = por %p194, %p195
    %p197 = scmp.ne.s32.totalorder %s188, %s189
    %p198 = scmp.eq.s32.totalorder %s28, 0
    %p199 = por %p197, %p198
    %p200 = scmp.ne.s32.totalorder %s188, %s189
    %p201 = scmp.eq.s32.totalorder %s29, 2
    %p202 = por %p200, %p201
    %p204 = scmp.ne.s32.totalorder %s189, %s203
    %p205 = scmp.eq.s32.totalorder %s29, 0
    %p206 = por %p204, %p205
    %s208 = sadd.s32 %s207, 1
    %p211 = scmp.eq.s32.totalorder %s23, 2
    %p212 = scmp.ne.s32.totalorder %s207, %s209
    %p213 = scmp.eq.s32.totalorder %s23, 0
    %p214 = por %p212, %p213
    %p215 = scmp.ne.s32.totalorder %s207, %s209
    %p216 = scmp.eq.s32.totalorder %s28, 2
    %p217 = por %p215, %p216
    %p218 = scmp.ne.s32.totalorder %s209, %s210
    %p219 = scmp.eq.s32.totalorder %s28, 0
    %p220 = por %p218, %p219
    %p221 = scmp.ne.s32.totalorder %s209, %s210
    %p222 = scmp.eq.s32.totalorder %s29, 2
    %p223 = por %p221, %p222
    %p225 = scmp.ne.s32.totalorder %s210, %s224
    %p226 = scmp.eq.s32.totalorder %s29, 0
    %p227 = por %p225, %p226
    %s229 = sadd.s32 %s228, 1
    %p232 = scmp.eq.s32.totalorder %s23, 2
    %p233 = scmp.ne.s32.totalorder %s228, %s230
    %p234 = scmp.eq.s32.totalorder %s23, 0
    %p235 = por %p233, %p234
    %p236 = scmp.ne.s32.totalorder %s228, %s230
    %p237 = scmp.eq.s32.totalorder %s28, 2
    %p238 = por %p236, %p237
    %p239 = scmp.ne.s32.totalorder %s230, %s231
    %p240 = scmp.eq.s32.totalorder %s28, 0
    %p241 = por %p239, %p240
    %p242 = scmp.ne.s32.totalorder %s230, %s231
    %p243 = scmp.eq.s32.totalorder %s29, 2
    %p244 = por %p242, %p243
    %p246 = scmp.ne.s32.totalorder %s231, %s245
    %p247 = scmp.eq.s32.totalorder %s29, 0
    %p248 = por %p246, %p247
    %s250 = sadd.s32 %s249, 1
    %p253 = scmp.eq.s32.totalorder %s23, 2
    %p254 = scmp.ne.s32.totalorder %s249, %s251
    %p255 = scmp.eq.s32.totalorder %s23, 0
    %p256 = por %p254, %p255
    %p257 = scmp.ne.s32.totalorder %s249, %s251
    %p258 = scmp.eq.s32.totalorder %s28, 2
    %p259 = por %p257, %p258
    %p260 = scmp.ne.s32.totalorder %s251, %s252
    %p261 = scmp.eq.s32.totalorder %s28, 0
    %p262 = por %p260, %p261
    %p263 = scmp.ne.s32.totalorder %s251, %s252
    %p264 = scmp.eq.s32.totalorder %s29, 2
    %p265 = por %p263, %p264
    %p267 = scmp.ne.s32.totalorder %s252, %s266
    %p268 = scmp.eq.s32.totalorder %s29, 0
    %p269 = por %p267, %p268
    %s271 = sadd.s32 %s270, 1
    %p274 = scmp.eq.s32.totalorder %s23, 2
    %p275 = scmp.ne.s32.totalorder %s270, %s272
    %p276 = scmp.eq.s32.totalorder %s23, 0
    %p277 = por %p275, %p276
    %p278 = scmp.ne.s32.totalorder %s270, %s272
    %p279 = scmp.eq.s32.totalorder %s28, 2
    %p280 = por %p278, %p279
    %p281 = scmp.ne.s32.totalorder %s272, %s273
    %p282 = scmp.eq.s32.totalorder %s28, 0
    %p283 = por %p281, %p282
    %p284 = scmp.ne.s32.totalorder %s272, %s273
    %p285 = scmp.eq.s32.totalorder %s29, 2
    %p286 = por %p284, %p285
    %p288 = scmp.ne.s32.totalorder %s273, %s287
    %p289 = scmp.eq.s32.totalorder %s29, 0
    %p290 = por %p288, %p289
    %p291 = scmp.le.s32.totalorder 1, %s23
    %p292 = scmp.lt.s32.totalorder %s23, 4
    %p293 = pnand %p291, %p292
    %p294 = pneg %p293
    // Predicated region
    $region9: #{gcn_forward.1} parent=5 // pred_check
      _
    $region10: #{gcn_forward.1} parent=5 // pred_check_branch
      %296 = sbr.rel (%p293) target = $region12
    $region11: #{gcn_forward.1} parent=5 // pred_region
      %s297 = ssub.s32 %s23, 1
      // Predicated region
      $region13: #{gcn_forward.1} parent=11 // pred_check
        %p298 = pneg %p56
      $region14: #{gcn_forward.1} parent=11 // pred_check_branch
        %300 = sbr.rel (%p298) target = $region16
      $region15: #{gcn_forward.1} parent=11 // pred_region
        _
      $region16: #{gcn_forward.1} parent=11 // pred_fallthru
        _
      // Predicated region
      $region17: #{gcn_forward.1} parent=11 // pred_check
        %p301 = pneg %p157
      $region18: #{gcn_forward.1} parent=11 // pred_check_branch
        %303 = sbr.rel (%p301) target = $region20
      $region19: #{gcn_forward.1} parent=11 // pred_region
        _
      $region20: #{gcn_forward.1} parent=11 // pred_fallthru
        _
      // Predicated region
      $region21: #{gcn_forward.1} parent=11 // pred_check
        %p304 = pneg %p178
      $region22: #{gcn_forward.1} parent=11 // pred_check_branch
        %306 = sbr.rel (%p304) target = $region24
      $region23: #{gcn_forward.1} parent=11 // pred_region
        _
      $region24: #{gcn_forward.1} parent=11 // pred_fallthru
        _
      // Predicated region
      $region25: #{gcn_forward.1} parent=11 // pred_check
        %p307 = pneg %p199
      $region26: #{gcn_forward.1} parent=11 // pred_check_branch
        %309 = sbr.rel (%p307) target = $region28
      $region27: #{gcn_forward.1} parent=11 // pred_region
        _
      $region28: #{gcn_forward.1} parent=11 // pred_fallthru
        _
      // Predicated region
      $region29: #{gcn_forward.1} parent=11 // pred_check
        %p310 = pneg %p220
      $region30: #{gcn_forward.1} parent=11 // pred_check_branch
        %312 = sbr.rel (%p310) target = $region32
      $region31: #{gcn_forward.1} parent=11 // pred_region
        _
      $region32: #{gcn_forward.1} parent=11 // pred_fallthru
        _
      // Predicated region
      $region33: #{gcn_forward.1} parent=11 // pred_check
        %p313 = pneg %p241
      $region34: #{gcn_forward.1} parent=11 // pred_check_branch
        %315 = sbr.rel (%p313) target = $region36
      $region35: #{gcn_forward.1} parent=11 // pred_region
        _
      $region36: #{gcn_forward.1} parent=11 // pred_fallthru
        _
      // Predicated region
      $region37: #{gcn_forward.1} parent=11 // pred_check
        %p316 = pneg %p262
      $region38: #{gcn_forward.1} parent=11 // pred_check_branch
        %318 = sbr.rel (%p316) target = $region40
      $region39: #{gcn_forward.1} parent=11 // pred_region
        _
      $region40: #{gcn_forward.1} parent=11 // pred_fallthru
        _
    $region12: #{gcn_forward.1} parent=5 // pred_fallthru
      _
    %p319 = scmp.lt.s32.totalorder %s23, 3
    // Predicated region
    $region41: #{gcn_forward.1} parent=5 // pred_check
      %p320 = pneg %p319
    $region42: #{gcn_forward.1} parent=5 // pred_check_branch
      %322 = sbr.rel (%p320) target = $region44
    $region43: #{gcn_forward.1} parent=5 // pred_region
      // Predicated region
      $region45: #{gcn_forward.1} parent=43 // pred_check
        %p323 = pneg %p78
      $region46: #{gcn_forward.1} parent=43 // pred_check_branch
        %325 = sbr.rel (%p323) target = $region48
      $region47: #{gcn_forward.1} parent=43 // pred_region
        %p326 = scmp.lt.s32.totalorder %s30, 2
        %s327 = scalar_select %p326, %s30, 2
        %p328 = scmp.lt.s32.totalorder %s31, 0
        %s329 = scalar_select %p328, %s31, 0
        %s330 = smul.addr %s327, 2
        %s331 = sadd.s32 %s329, %s330
        %s332 = smul.addr %s331, 4
        %s333 = scalar_lea.vmem %s2, %s332
      $region48: #{gcn_forward.1} parent=43 // pred_fallthru
        _
      // Predicated region
      $region49: #{gcn_forward.1} parent=43 // pred_check
        %p334 = pneg %p104
      $region50: #{gcn_forward.1} parent=43 // pred_check_branch
        %336 = sbr.rel (%p334) target = $region52
      $region51: #{gcn_forward.1} parent=43 // pred_region
        %p337 = scmp.lt.s32.totalorder %s30, 2
        %s338 = scalar_select %p337, %s30, 2
        %s339 = smul.addr %s338, 16
        %s340 = smul.addr %s339, 4
        %s341 = scalar_lea.vmem %s3, %s340
      $region52: #{gcn_forward.1} parent=43 // pred_fallthru
        _
      // Predicated region
      $region53: #{gcn_forward.1} parent=43 // pred_check
        %p342 = pneg %p130
      $region54: #{gcn_forward.1} parent=43 // pred_check_branch
        %344 = sbr.rel (%p342) target = $region56
      $region55: #{gcn_forward.1} parent=43 // pred_region
        %p345 = scmp.lt.s32.totalorder %s30, 2
        %s346 = scalar_select %p345, %s30, 2
        %s347 = scalar_lea.vmem %s4, %s346
      $region56: #{gcn_forward.1} parent=43 // pred_fallthru
        _
    $region44: #{gcn_forward.1} parent=5 // pred_fallthru
      _
    %p348 = scmp.le.s32.totalorder 1, %s23
    %p349 = scmp.lt.s32.totalorder %s23, 4
    %p350 = pnand %p348, %p349
    %p351 = pneg %p350
    // Predicated region
    $region57: #{gcn_forward.1} parent=5 // pred_check
      _
    $region58: #{gcn_forward.1} parent=5 // pred_check_branch
      %353 = sbr.rel (%p350) target = $region60
    $region59: #{gcn_forward.1} parent=5 // pred_region
      %s354 = ssub.s32 %s23, 1
      %p355 = pneg %p56
      %p356 = pneg %p53
      %p357 = scmp.lt.s32.totalorder %s32, 2
      %s358 = scalar_select %p357, %s32, 2
      %p359 = scmp.lt.s32.totalorder %s33, 0
      %s360 = scalar_select %p359, %s33, 0
      %s361 = smul.addr %s358, 2
      %s362 = sadd.s32 %s360, %s361
      %s363 = smul.addr %s362, 4
      %s364 = scalar_lea.vmem %s2, %s363
      %p365 = pneg %p84
      %p366 = pneg %p81
      %p367 = scmp.lt.s32.totalorder %s32, 2
      %s368 = scalar_select %p367, %s32, 2
      %s369 = smul.addr %s368, 16
      %s370 = smul.addr %s369, 4
      %s371 = scalar_lea.vmem %s3, %s370
      %p372 = pneg %p110
      %p373 = pneg %p107
      %p374 = scmp.lt.s32.totalorder %s32, 2
      %s375 = scalar_select %p374, %s32, 2
      %s376 = scalar_lea.vmem %s4, %s375
      %p377 = pneg %p136
      %p378 = pneg %p133
      %p379 = pneg %p157
      %p380 = pneg %p154
      %p381 = pneg %p178
      %p382 = pneg %p175
      %p383 = pneg %p199
      %p384 = pneg %p196
      %p385 = pneg %p220
      %p386 = pneg %p217
      %p387 = pneg %p241
      %p388 = pneg %p238
      %p389 = pneg %p262
      %p390 = pneg %p259
      %p391 = pneg %p283
      %p392 = pneg %p280
      %p393 = scmp.lt.s32.totalorder %s32, 2
      %s394 = scalar_select %p393, %s32, 2
      %p395 = scmp.lt.s32.totalorder %s33, 0
      %s396 = scalar_select %p395, %s33, 0
      %s397 = smul.addr %s394, 2
      %s398 = sadd.s32 %s396, %s397
      %s399 = smul.addr %s398, 4
      %s400 = scalar_lea.vmem %s2, %s399
      %p401 = scmp.lt.s32.totalorder %s32, 2
      %s402 = scalar_select %p401, %s32, 2
      %s403 = smul.addr %s402, 16
      %s404 = smul.addr %s403, 4
      %s405 = scalar_lea.vmem %s3, %s404
      %p406 = scmp.lt.s32.totalorder %s32, 2
      %s407 = scalar_select %p406, %s32, 2
      %s408 = scalar_lea.vmem %s4, %s407
      %p410 = scmp.eq.s32.totalorder %s32, 0
      %p411 = scmp.eq.s32.totalorder %s33, 0
      %p412 = pnand %p410, %p411
      %p413 = pneg %p412
      // Predicated region
      $region61: #{gcn_forward.1} parent=59 // pred_check
        _
      $region62: #{gcn_forward.1} parent=59 // pred_check_branch
        %415 = sbr.rel (%p412) target = $region64
      $region63: #{gcn_forward.1} parent=59 // pred_region
        %v416 = vld [vmem:[%s1] sm:$0xf]
        %v417 = vld [vmem:[%s1 + $0x4] sm:$0xf]
        %v420 = vunpack.c.l.b16 %v416
        %v421 = vunpack.c.l.b16 %v417
        %v422 = vpack.c.b16 %v421, %v420
        %424 = vst [vmem:[#allocation2] sm:$0xff] %v422
      $region64: #{gcn_forward.1} parent=59 // pred_fallthru
        _
      // Predicated region
      $region65: #{gcn_forward.1} parent=59 // pred_check
        %p425 = pneg %p411
      $region66: #{gcn_forward.1} parent=59 // pred_check_branch
        %427 = sbr.rel (%p425) target = $region68
      $region67: #{gcn_forward.1} parent=59 // pred_region
        %428 = vst [vmem:[#allocation3] sm:$0xff] 0.0
        %429 = vst [vmem:[#allocation3 + $0x8] sm:$0xff] 0.0
      $region68: #{gcn_forward.1} parent=59 // pred_fallthru
        _
      %s430 = smul.u32 %s33, 16
      %s431 = sshra.s32 %s430, 4
      %s432 = sand.u32 %s430, 15
      %s433 = smul.addr %s431, 8
      %s434 = scalar_lea.vmem [#allocation2], %s433
      %v435 = vld [vmem:[%s434] sm:$0xff]
      %v436 = vld [vmem:[%s405] sm:$0xf]
      %v437 = vld [vmem:[%s405 + $0x4] sm:$0xf]
      %v438 = vld [vmem:[%s405 + $0x8] sm:$0xf]
      %v439 = vld [vmem:[%s405 + $0xc] sm:$0xf]
      %v440 = vld [vmem:[%s405 + $0x10] sm:$0xf]
      %v441 = vld [vmem:[%s405 + $0x14] sm:$0xf]
      %v442 = vld [vmem:[%s405 + $0x18] sm:$0xf]
      %v443 = vld [vmem:[%s405 + $0x1c] sm:$0xf]
      %v444 = vld [vmem:[%s405 + $0x20] sm:$0xf]
      %v445 = vld [vmem:[%s405 + $0x24] sm:$0xf]
      %v446 = vld [vmem:[%s405 + $0x28] sm:$0xf]
      %v447 = vld [vmem:[%s405 + $0x2c] sm:$0xf]
      %v448 = vld [vmem:[%s405 + $0x30] sm:$0xf]
      %v449 = vld [vmem:[%s405 + $0x34] sm:$0xf]
      %v450 = vld [vmem:[%s405 + $0x38] sm:$0xf]
      %v451 = vld [vmem:[%s405 + $0x3c] sm:$0xf]
      %v468 = vunpack.c.l.b16 %v436
      %v469 = vunpack.c.l.b16 %v437
      %v470 = vunpack.c.l.b16 %v438
      %v471 = vunpack.c.l.b16 %v439
      %v472 = vunpack.c.l.b16 %v440
      %v473 = vunpack.c.l.b16 %v441
      %v474 = vunpack.c.l.b16 %v442
      %v475 = vunpack.c.l.b16 %v443
      %v476 = vunpack.c.l.b16 %v444
      %v477 = vunpack.c.l.b16 %v445
      %v478 = vunpack.c.l.b16 %v446
      %v479 = vunpack.c.l.b16 %v447
      %v480 = vunpack.c.l.b16 %v448
      %v481 = vunpack.c.l.b16 %v449
      %v482 = vunpack.c.l.b16 %v450
      %v483 = vunpack.c.l.b16 %v451
      %v484 = vpack.c.b16 %v469, %v468
      %v485 = vpack.c.b16 %v471, %v470
      %v486 = vpack.c.b16 %v473, %v472
      %v487 = vpack.c.b16 %v475, %v474
      %v488 = vpack.c.b16 %v477, %v476
      %v489 = vpack.c.b16 %v479, %v478
      %v490 = vpack.c.b16 %v481, %v480
      %v491 = vpack.c.b16 %v483, %v482
      %500 = vmatprep.subr.bf16.mxu0 0
      %501 = vmatpush1.bf16.msra.mxu0 %v484
      %502 = vmatprep.subr.bf16.mxu0 0
      %503 = vmatpush1.bf16.msra.mxu0 %v485
      %504 = vmatprep.subr.bf16.mxu0 0
      %505 = vmatpush1.bf16.msra.mxu0 %v486
      %506 = vmatprep.subr.bf16.mxu0 0
      %507 = vmatpush1.bf16.msra.mxu0 %v487
      %508 = vmatprep.subr.bf16.mxu0 0
      %509 = vmatpush1.bf16.msra.mxu0 %v488
      %510 = vmatprep.subr.bf16.mxu0 0
      %511 = vmatpush1.bf16.msra.mxu0 %v489
      %512 = vmatprep.subr.bf16.mxu0 0
      %513 = vmatpush1.bf16.msra.mxu0 %v490
      %514 = vmatprep.subr.bf16.mxu0 0
      %515 = vmatpush1.bf16.msra.mxu0 %v491
      %516 = vmatprep.subr.bf16.mxu0 0
      %517 = vmatpush1.bf16.msra.mxu0 0
      %518 = vmatprep.subr.bf16.mxu0 0
      %519 = vmatpush1.bf16.msra.mxu0 0
      %520 = vmatprep.subr.bf16.mxu0 0
      %521 = vmatpush1.bf16.msra.mxu0 0
      %522 = vmatprep.subr.bf16.mxu0 0
      %523 = vmatpush1.bf16.msra.mxu0 0
      %524 = vmatprep.subr.bf16.mxu0 0
      %525 = vmatpush1.bf16.msra.mxu0 0
      %526 = vmatprep.subr.bf16.mxu0 0
      %527 = vmatpush1.bf16.msra.mxu0 0
      %528 = vmatprep.subr.bf16.mxu0 0
      %529 = vmatpush1.bf16.msra.mxu0 0
      %530 = vmatprep.subr.bf16.mxu0 0
      %531 = vmatpush1.bf16.msra.mxu0 0
      %532 = vmatprep.mubr.bf16.mxu0 0
      %533 = vmatmul.mubr.bf16.gmra.mrb[0].mxu0 %v435
      %v534 = vpop.f32.mrb[0].mxu0
      %v535 = vadd.f32 0.0, %v534
      %v536 = vpop.f32.mrb[0].mxu0
      %v537 = vpop.f32.mrb[0].mxu0
      %v538 = vadd.f32 0.0, %v537
      %v539 = vpop.f32.mrb[0].mxu0
      %540 = vdwg.mxu0
      %v541 = vld [vmem:[#allocation3] sm:$0xff]
      %v542 = vld [vmem:[#allocation3 + $0x8] sm:$0xff]
      %v543 = vld [vmem:[%s400] sm:$0xf]
      %v544 = vld [vmem:[%s400 + $0x4] sm:$0xf]
      %v545 = vpack.c.bf16 %v538, %v535
      %v548 = vunpack.c.l.b16 %v543
      %v549 = vunpack.c.l.b16 %v544
      %v550 = vpack.c.b16 %v549, %v548
      %vm551 = vcmask 130048
      %v553 = vsel %vm551, %v550, 0
      %555 = vmatprep.subr.bf16.mxu0 0
      %556 = vmatpush1.bf16.msra.mxu0 %v545
      %557 = vmatprep.subr.bf16.mxu0 0
      %558 = vmatpush1.bf16.msra.mxu0 0
      %559 = vmatprep.subr.bf16.mxu0 0
      %560 = vmatpush1.bf16.msra.mxu0 0
      %561 = vmatprep.subr.bf16.mxu0 0
      %562 = vmatpush1.bf16.msra.mxu0 0
      %563 = vmatprep.subr.bf16.mxu0 0
      %564 = vmatpush1.bf16.msra.mxu0 0
      %565 = vmatprep.subr.bf16.mxu0 0
      %566 = vmatpush1.bf16.msra.mxu0 0
      %567 = vmatprep.subr.bf16.mxu0 0
      %568 = vmatpush1.bf16.msra.mxu0 0
      %569 = vmatprep.subr.bf16.mxu0 0
      %570 = vmatpush1.bf16.msra.mxu0 0
      %571 = vmatprep.subr.bf16.mxu0 0
      %572 = vmatpush1.bf16.msra.mxu0 0
      %573 = vmatprep.subr.bf16.mxu0 0
      %574 = vmatpush1.bf16.msra.mxu0 0
      %575 = vmatprep.subr.bf16.mxu0 0
      %576 = vmatpush1.bf16.msra.mxu0 0
      %577 = vmatprep.subr.bf16.mxu0 0
      %578 = vmatpush1.bf16.msra.mxu0 0
      %579 = vmatprep.subr.bf16.mxu0 0
      %580 = vmatpush1.bf16.msra.mxu0 0
      %581 = vmatprep.subr.bf16.mxu0 0
      %582 = vmatpush1.bf16.msra.mxu0 0
      %583 = vmatprep.subr.bf16.mxu0 0
      %584 = vmatpush1.bf16.msra.mxu0 0
      %585 = vmatprep.subr.bf16.mxu0 0
      %586 = vmatpush1.bf16.msra.mxu0 0
      %587 = vmatprep.mubr.bf16.mxu0 0
      %588 = vmatmul.mubr.bf16.gmra.mrb[0].mxu0 %v553
      %v589 = vpop.f32.mrb[0].mxu0
      %v590 = vadd.f32 0.0, %v589
      %v591 = vpop.f32.mrb[0].mxu0
      %v592 = vpop.f32.mrb[0].mxu0
      %v593 = vadd.f32 0.0, %v592
      %v594 = vpop.f32.mrb[0].mxu0
      %595 = vdwg.mxu0
      %v596 = vadd.f32 %v541, %v590
      %v597 = vadd.f32 %v542, %v593
      %598 = vst [vmem:[#allocation3] sm:$0xff] %v596
      %599 = vst [vmem:[#allocation3 + $0x8] sm:$0xff] %v597
      %p600 = scmp.lt.s32.totalorder %s32, 2
      %p601 = pnand %p411, %p600
      %p602 = pneg %p601
      // Predicated region
      $region69: #{gcn_forward.1} parent=59 // pred_check
        _
      $region70: #{gcn_forward.1} parent=59 // pred_check_branch
        %604 = sbr.rel (%p601) target = $region72
      $region71: #{gcn_forward.1} parent=59 // pred_region
        %v605 = vld [vmem:[#allocation3] sm:$0xff]
        %v606 = vld [vmem:[#allocation3 + $0x8] sm:$0xff]
        %v607 = vld [vmem:[%s408] sm:$0x1]
        %v609 = vlaneseq
        %v610 = vshrl.u32 %v609, 7
        %v611 = vsub.s32 0, %v610
        %v612 = vrot.slane %v607, %v611
        %v614 = vadd.f32 %v605, %v612
        %v615 = vadd.f32 %v606, %v612
        %v616 = vmax.f32 %v614, 0.0
        %v617 = vmax.f32 %v615, 0.0
        %v618 = vpack.c.bf16 %v617, %v616
        %619 = vst [vmem:[#allocation2] sm:$0xff] %v618
      $region72: #{gcn_forward.1} parent=59 // pred_fallthru
        _
      %p620 = scmp.eq.s32.totalorder %s32, 2
      %p621 = pnand %p411, %p620
      %p622 = pneg %p621
      // Predicated region
      $region73: #{gcn_forward.1} parent=59 // pred_check
        _
      $region74: #{gcn_forward.1} parent=59 // pred_check_branch
        %624 = sbr.rel (%p621) target = $region76
      $region75: #{gcn_forward.1} parent=59 // pred_region
        %v625 = vld [vmem:[#allocation3] sm:$0xff]
        %v626 = vld [vmem:[#allocation3 + $0x8] sm:$0xff]
        %v627 = vld [vmem:[%s408] sm:$0x1]
        %v629 = vlaneseq
        %v630 = vshrl.u32 %v629, 7
        %v631 = vsub.s32 0, %v630
        %v632 = vrot.slane %v627, %v631
        %v634 = vadd.f32 %v625, %v632
        %v635 = vadd.f32 %v626, %v632
        %636 = vst [vmem:[#allocation3] sm:$0xff] %v634
        %637 = vst [vmem:[#allocation3 + $0x8] sm:$0xff] %v635
        %s638 = sld [smem:[#allocation6]]
        %s639 = sld [smem:[#allocation6 + $0x80]]
        %s640 = scalar_lea.vmem [#allocation3], %s638
        %v641 = vld [vmem:[%s640] sm:$0x1]
        %s642 = scalar_lea.vmem [#allocation3], %s639
        %v643 = vld [vmem:[%s642] sm:$0x1]
        %v644 = vmul.f32 %v641, %v643
        %645 = vst [vmem:[#allocation4] sm:$0x1] %v644
        %s646 = sld [smem:[#allocation6 + $0x1]]
        %s647 = sld [smem:[#allocation6 + $0x81]]
        %s648 = scalar_lea.vmem [#allocation3], %s646
        %v649 = vld [vmem:[%s648] sm:$0x1]
        %s650 = scalar_lea.vmem [#allocation3], %s647
        %v651 = vld [vmem:[%s650] sm:$0x1]
        %v652 = vmul.f32 %v649, %v651
        %653 = vst [vmem:[#allocation4 + $0x1] sm:$0x1] %v652
        %s654 = sld [smem:[#allocation6 + $0x2]]
        %s655 = sld [smem:[#allocation6 + $0x82]]
        %s656 = scalar_lea.vmem [#allocation3], %s654
        %v657 = vld [vmem:[%s656] sm:$0x1]
        %s658 = scalar_lea.vmem [#allocation3], %s655
        %v659 = vld [vmem:[%s658] sm:$0x1]
        %v660 = vmul.f32 %v657, %v659
        %661 = vst [vmem:[#allocation4 + $0x2] sm:$0x1] %v660
        %s662 = sld [smem:[#allocation6 + $0x3]]
        %s663 = sld [smem:[#allocation6 + $0x83]]
        %s664 = scalar_lea.vmem [#allocation3], %s662
        %v665 = vld [vmem:[%s664] sm:$0x1]
        %s666 = scalar_lea.vmem [#allocation3], %s663
        %v667 = vld [vmem:[%s666] sm:$0x1]
        %v668 = vmul.f32 %v665, %v667
        %669 = vst [vmem:[#allocation4 + $0x3] sm:$0x1] %v668
        %s670 = sld [smem:[#allocation6 + $0x4]]
        %s671 = sld [smem:[#allocation6 + $0x84]]
        %s672 = scalar_lea.vmem [#allocation3], %s670
        %v673 = vld [vmem:[%s672] sm:$0x1]
        %s674 = scalar_lea.vmem [#allocation3], %s671
        %v675 = vld [vmem:[%s674] sm:$0x1]
        %v676 = vmul.f32 %v673, %v675
        %677 = vst [vmem:[#allocation4 + $0x4] sm:$0x1] %v676
        %s678 = sld [smem:[#allocation6 + $0x5]]
        %s679 = sld [smem:[#allocation6 + $0x85]]
        %s680 = scalar_lea.vmem [#allocation3], %s678
        %v681 = vld [vmem:[%s680] sm:$0x1]
        %s682 = scalar_lea.vmem [#allocation3], %s679
        %v683 = vld [vmem:[%s682] sm:$0x1]
        %v684 = vmul.f32 %v681, %v683
        %685 = vst [vmem:[#allocation4 + $0x5] sm:$0x1] %v684
        %s686 = sld [smem:[#allocation6 + $0x6]]
        %s687 = sld [smem:[#allocation6 + $0x86]]
        %s688 = scalar_lea.vmem [#allocation3], %s686
        %v689 = vld [vmem:[%s688] sm:$0x1]
        %s690 = scalar_lea.vmem [#allocation3], %s687
        %v691 = vld [vmem:[%s690] sm:$0x1]
        %v692 = vmul.f32 %v689, %v691
        %693 = vst [vmem:[#allocation4 + $0x6] sm:$0x1] %v692
        %s694 = sld [smem:[#allocation6 + $0x7]]
        %s695 = sld [smem:[#allocation6 + $0x87]]
        %s696 = scalar_lea.vmem [#allocation3], %s694
        %v697 = vld [vmem:[%s696] sm:$0x1]
        %s698 = scalar_lea.vmem [#allocation3], %s695
        %v699 = vld [vmem:[%s698] sm:$0x1]
        %v700 = vmul.f32 %v697, %v699
        %701 = vst [vmem:[#allocation4 + $0x7] sm:$0x1] %v700
        %s702 = sld [smem:[#allocation6 + $0x8]]
        %s703 = sld [smem:[#allocation6 + $0x88]]
        %s704 = scalar_lea.vmem [#allocation3], %s702
        %v705 = vld [vmem:[%s704] sm:$0x1]
        %s706 = scalar_lea.vmem [#allocation3], %s703
        %v707 = vld [vmem:[%s706] sm:$0x1]
        %v708 = vmul.f32 %v705, %v707
        %709 = vst [vmem:[#allocation4 + $0x8] sm:$0x1] %v708
        %s710 = sld [smem:[#allocation6 + $0x9]]
        %s711 = sld [smem:[#allocation6 + $0x89]]
        %s712 = scalar_lea.vmem [#allocation3], %s710
        %v713 = vld [vmem:[%s712] sm:$0x1]
        %s714 = scalar_lea.vmem [#allocation3], %s711
        %v715 = vld [vmem:[%s714] sm:$0x1]
        %v716 = vmul.f32 %v713, %v715
        %717 = vst [vmem:[#allocation4 + $0x9] sm:$0x1] %v716
        %s718 = sld [smem:[#allocation6 + $0xa]]
        %s719 = sld [smem:[#allocation6 + $0x8a]]
        %s720 = scalar_lea.vmem [#allocation3], %s718
        %v721 = vld [vmem:[%s720] sm:$0x1]
        %s722 = scalar_lea.vmem [#allocation3], %s719
        %v723 = vld [vmem:[%s722] sm:$0x1]
        %v724 = vmul.f32 %v721, %v723
        %725 = vst [vmem:[#allocation4 + $0xa] sm:$0x1] %v724
        %s726 = sld [smem:[#allocation6 + $0xb]]
        %s727 = sld [smem:[#allocation6 + $0x8b]]
        %s728 = scalar_lea.vmem [#allocation3], %s726
        %v729 = vld [vmem:[%s728] sm:$0x1]
        %s730 = scalar_lea.vmem [#allocation3], %s727
        %v731 = vld [vmem:[%s730] sm:$0x1]
        %v732 = vmul.f32 %v729, %v731
        %733 = vst [vmem:[#allocation4 + $0xb] sm:$0x1] %v732
        %s734 = sld [smem:[#allocation6 + $0xc]]
        %s735 = sld [smem:[#allocation6 + $0x8c]]
        %s736 = scalar_lea.vmem [#allocation3], %s734
        %v737 = vld [vmem:[%s736] sm:$0x1]
        %s738 = scalar_lea.vmem [#allocation3], %s735
        %v739 = vld [vmem:[%s738] sm:$0x1]
        %v740 = vmul.f32 %v737, %v739
        %741 = vst [vmem:[#allocation4 + $0xc] sm:$0x1] %v740
        %s742 = sld [smem:[#allocation6 + $0xd]]
        %s743 = sld [smem:[#allocation6 + $0x8d]]
        %s744 = scalar_lea.vmem [#allocation3], %s742
        %v745 = vld [vmem:[%s744] sm:$0x1]
        %s746 = scalar_lea.vmem [#allocation3], %s743
        %v747 = vld [vmem:[%s746] sm:$0x1]
        %v748 = vmul.f32 %v745, %v747
        %749 = vst [vmem:[#allocation4 + $0xd] sm:$0x1] %v748
        %s750 = sld [smem:[#allocation6 + $0xe]]
        %s751 = sld [smem:[#allocation6 + $0x8e]]
        %s752 = scalar_lea.vmem [#allocation3], %s750
        %v753 = vld [vmem:[%s752] sm:$0x1]
        %s754 = scalar_lea.vmem [#allocation3], %s751
        %v755 = vld [vmem:[%s754] sm:$0x1]
        %v756 = vmul.f32 %v753, %v755
        %757 = vst [vmem:[#allocation4 + $0xe] sm:$0x1] %v756
        %s758 = sld [smem:[#allocation6 + $0xf]]
        %s759 = sld [smem:[#allocation6 + $0x8f]]
        %s760 = scalar_lea.vmem [#allocation3], %s758
        %v761 = vld [vmem:[%s760] sm:$0x1]
        %s762 = scalar_lea.vmem [#allocation3], %s759
        %v763 = vld [vmem:[%s762] sm:$0x1]
        %v764 = vmul.f32 %v761, %v763
        %765 = vst [vmem:[#allocation4 + $0xf] sm:$0x1] %v764
        %v766 = vld [vmem:[#allocation4] sm:$0xff]
        %v767 = vld [vmem:[#allocation4 + $0x8] sm:$0xff]
        %v768 = vpack.c.bf16 %v767, %v766
        %v769 = vld [vmem:[%s5] sm:$0xf]
        %v770 = vld [vmem:[%s5 + $0x4] sm:$0xf]
        %v771 = vld [vmem:[%s5 + $0x8] sm:$0xf]
        %v772 = vld [vmem:[%s5 + $0xc] sm:$0xf]
        %v773 = vld [vmem:[%s5 + $0x10] sm:$0xf]
        %v774 = vld [vmem:[%s5 + $0x14] sm:$0xf]
        %v775 = vld [vmem:[%s5 + $0x18] sm:$0xf]
        %v776 = vld [vmem:[%s5 + $0x1c] sm:$0xf]
        %v777 = vld [vmem:[%s5 + $0x20] sm:$0xf]
        %v778 = vld [vmem:[%s5 + $0x24] sm:$0xf]
        %v779 = vld [vmem:[%s5 + $0x28] sm:$0xf]
        %v780 = vld [vmem:[%s5 + $0x2c] sm:$0xf]
        %v781 = vld [vmem:[%s5 + $0x30] sm:$0xf]
        %v782 = vld [vmem:[%s5 + $0x34] sm:$0xf]
        %v783 = vld [vmem:[%s5 + $0x38] sm:$0xf]
        %v784 = vld [vmem:[%s5 + $0x3c] sm:$0xf]
        %v785 = vld [vmem:[%s8] sm:$0x1]
        %v787 = vlaneseq
        %v788 = vshrl.u32 %v787, 7
        %v789 = vsub.s32 0, %v788
        %v790 = vrot.slane %v785, %v789
        %v808 = vunpack.c.l.b16 %v769
        %v809 = vunpack.c.l.b16 %v770
        %v810 = vunpack.c.l.b16 %v771
        %v811 = vunpack.c.l.b16 %v772
        %v812 = vunpack.c.l.b16 %v773
        %v813 = vunpack.c.l.b16 %v774
        %v814 = vunpack.c.l.b16 %v775
        %v815 = vunpack.c.l.b16 %v776
        %v816 = vunpack.c.l.b16 %v777
        %v817 = vunpack.c.l.b16 %v778
        %v818 = vunpack.c.l.b16 %v779
        %v819 = vunpack.c.l.b16 %v780
        %v820 = vunpack.c.l.b16 %v781
        %v821 = vunpack.c.l.b16 %v782
        %v822 = vunpack.c.l.b16 %v783
        %v823 = vunpack.c.l.b16 %v784
        %v824 = vpack.c.b16 %v809, %v808
        %v825 = vpack.c.b16 %v811, %v810
        %v826 = vpack.c.b16 %v813, %v812
        %v827 = vpack.c.b16 %v815, %v814
        %v828 = vpack.c.b16 %v817, %v816
        %v829 = vpack.c.b16 %v819, %v818
        %v830 = vpack.c.b16 %v821, %v820
        %v831 = vpack.c.b16 %v823, %v822
        %840 = vmatprep.subr.bf16.mxu0 0
        %841 = vmatpush1.bf16.msra.mxu0 %v824
        %842 = vmatprep.subr.bf16.mxu0 0
        %843 = vmatpush1.bf16.msra.mxu0 %v825
        %844 = vmatprep.subr.bf16.mxu0 0
        %845 = vmatpush1.bf16.msra.mxu0 %v826
        %846 = vmatprep.subr.bf16.mxu0 0
        %847 = vmatpush1.bf16.msra.mxu0 %v827
        %848 = vmatprep.subr.bf16.mxu0 0
        %849 = vmatpush1.bf16.msra.mxu0 %v828
        %850 = vmatprep.subr.bf16.mxu0 0
        %851 = vmatpush1.bf16.msra.mxu0 %v829
        %852 = vmatprep.subr.bf16.mxu0 0
        %853 = vmatpush1.bf16.msra.mxu0 %v830
        %854 = vmatprep.subr.bf16.mxu0 0
        %855 = vmatpush1.bf16.msra.mxu0 %v831
        %856 = vmatprep.subr.bf16.mxu0 0
        %857 = vmatpush1.bf16.msra.mxu0 0
        %858 = vmatprep.subr.bf16.mxu0 0
        %859 = vmatpush1.bf16.msra.mxu0 0
        %860 = vmatprep.subr.bf16.mxu0 0
        %861 = vmatpush1.bf16.msra.mxu0 0
        %862 = vmatprep.subr.bf16.mxu0 0
        %863 = vmatpush1.bf16.msra.mxu0 0
        %864 = vmatprep.subr.bf16.mxu0 0
        %865 = vmatpush1.bf16.msra.mxu0 0
        %866 = vmatprep.subr.bf16.mxu0 0
        %867 = vmatpush1.bf16.msra.mxu0 0
        %868 = vmatprep.subr.bf16.mxu0 0
        %869 = vmatpush1.bf16.msra.mxu0 0
        %870 = vmatprep.subr.bf16.mxu0 0
        %871 = vmatpush1.bf16.msra.mxu0 0
        %872 = vmatprep.mubr.bf16.mxu0 0
        %873 = vmatmul.mubr.bf16.gmra.mrb[0].mxu0 %v768
        %v874 = vpop.f32.mrb[0].mxu0
        %v875 = vadd.f32 %v790, %v874
        %v876 = vpop.f32.mrb[0].mxu0
        %v877 = vpop.f32.mrb[0].mxu0
        %v878 = vadd.f32 %v790, %v877
        %v879 = vpop.f32.mrb[0].mxu0
        %880 = vdwg.mxu0
        %v881 = vmax.f32 %v875, 0.0
        %v882 = vmax.f32 %v878, 0.0
        %v883 = vpack.c.bf16 %v882, %v881
        %v884 = vld [vmem:[%s6] sm:$0xf]
        %v885 = vld [vmem:[%s6 + $0x4] sm:$0xf]
        %v886 = vld [vmem:[%s6 + $0x8] sm:$0xf]
        %v887 = vld [vmem:[%s6 + $0xc] sm:$0xf]
        %v888 = vld [vmem:[%s6 + $0x10] sm:$0xf]
        %v889 = vld [vmem:[%s6 + $0x14] sm:$0xf]
        %v890 = vld [vmem:[%s6 + $0x18] sm:$0xf]
        %v891 = vld [vmem:[%s6 + $0x1c] sm:$0xf]
        %v892 = vld [vmem:[%s6 + $0x20] sm:$0xf]
        %v893 = vld [vmem:[%s6 + $0x24] sm:$0xf]
        %v894 = vld [vmem:[%s6 + $0x28] sm:$0xf]
        %v895 = vld [vmem:[%s6 + $0x2c] sm:$0xf]
        %v896 = vld [vmem:[%s6 + $0x30] sm:$0xf]
        %v897 = vld [vmem:[%s6 + $0x34] sm:$0xf]
        %v898 = vld [vmem:[%s6 + $0x38] sm:$0xf]
        %v899 = vld [vmem:[%s6 + $0x3c] sm:$0xf]
        %v900 = vld [vmem:[%s9] sm:$0x1]
        %v902 = vlaneseq
        %v903 = vshrl.u32 %v902, 7
        %v904 = vsub.s32 0, %v903
        %v905 = vrot.slane %v900, %v904
        %v923 = vunpack.c.l.b16 %v884
        %v924 = vunpack.c.l.b16 %v885
        %v925 = vunpack.c.l.b16 %v886
        %v926 = vunpack.c.l.b16 %v887
        %v927 = vunpack.c.l.b16 %v888
        %v928 = vunpack.c.l.b16 %v889
        %v929 = vunpack.c.l.b16 %v890
        %v930 = vunpack.c.l.b16 %v891
        %v931 = vunpack.c.l.b16 %v892
        %v932 = vunpack.c.l.b16 %v893
        %v933 = vunpack.c.l.b16 %v894
        %v934 = vunpack.c.l.b16 %v895
        %v935 = vunpack.c.l.b16 %v896
        %v936 = vunpack.c.l.b16 %v897
        %v937 = vunpack.c.l.b16 %v898
        %v938 = vunpack.c.l.b16 %v899
        %v939 = vpack.c.b16 %v924, %v923
        %v940 = vpack.c.b16 %v926, %v925
        %v941 = vpack.c.b16 %v928, %v927
        %v942 = vpack.c.b16 %v930, %v929
        %v943 = vpack.c.b16 %v932, %v931
        %v944 = vpack.c.b16 %v934, %v933
        %v945 = vpack.c.b16 %v936, %v935
        %v946 = vpack.c.b16 %v938, %v937
        %955 = vmatprep.subr.bf16.mxu0 0
        %956 = vmatpush1.bf16.msra.mxu0 %v939
        %957 = vmatprep.subr.bf16.mxu0 0
        %958 = vmatpush1.bf16.msra.mxu0 %v940
        %959 = vmatprep.subr.bf16.mxu0 0
        %960 = vmatpush1.bf16.msra.mxu0 %v941
        %961 = vmatprep.subr.bf16.mxu0 0
        %962 = vmatpush1.bf16.msra.mxu0 %v942
        %963 = vmatprep.subr.bf16.mxu0 0
        %964 = vmatpush1.bf16.msra.mxu0 %v943
        %965 = vmatprep.subr.bf16.mxu0 0
        %966 = vmatpush1.bf16.msra.mxu0 %v944
        %967 = vmatprep.subr.bf16.mxu0 0
        %968 = vmatpush1.bf16.msra.mxu0 %v945
        %969 = vmatprep.subr.bf16.mxu0 0
        %970 = vmatpush1.bf16.msra.mxu0 %v946
        %971 = vmatprep.subr.bf16.mxu0 0
        %972 = vmatpush1.bf16.msra.mxu0 0
        %973 = vmatprep.subr.bf16.mxu0 0
        %974 = vmatpush1.bf16.msra.mxu0 0
        %975 = vmatprep.subr.bf16.mxu0 0
        %976 = vmatpush1.bf16.msra.mxu0 0
        %977 = vmatprep.subr.bf16.mxu0 0
        %978 = vmatpush1.bf16.msra.mxu0 0
        %979 = vmatprep.subr.bf16.mxu0 0
        %980 = vmatpush1.bf16.msra.mxu0 0
        %981 = vmatprep.subr.bf16.mxu0 0
        %982 = vmatpush1.bf16.msra.mxu0 0
        %983 = vmatprep.subr.bf16.mxu0 0
        %984 = vmatpush1.bf16.msra.mxu0 0
        %985 = vmatprep.subr.bf16.mxu0 0
        %986 = vmatpush1.bf16.msra.mxu0 0
        %987 = vmatprep.mubr.bf16.mxu0 0
        %988 = vmatmul.mubr.bf16.gmra.mrb[0].mxu0 %v883
        %v989 = vpop.f32.mrb[0].mxu0
        %v990 = vadd.f32 %v905, %v989
        %v991 = vpop.f32.mrb[0].mxu0
        %v992 = vpop.f32.mrb[0].mxu0
        %v993 = vadd.f32 %v905, %v992
        %v994 = vpop.f32.mrb[0].mxu0
        %995 = vdwg.mxu0
        %v996 = vmax.f32 %v990, 0.0
        %v997 = vmax.f32 %v993, 0.0
        %v998 = vpack.c.bf16 %v997, %v996
        %v999 = vld [vmem:[%s7] sm:$0xf]
        %v1000 = vld [vmem:[%s7 + $0x4] sm:$0xf]
        %v1001 = vld [vmem:[%s7 + $0x8] sm:$0xf]
        %v1002 = vld [vmem:[%s7 + $0xc] sm:$0xf]
        %v1003 = vld [vmem:[%s7 + $0x10] sm:$0xf]
        %v1004 = vld [vmem:[%s7 + $0x14] sm:$0xf]
        %v1005 = vld [vmem:[%s7 + $0x18] sm:$0xf]
        %v1006 = vld [vmem:[%s7 + $0x1c] sm:$0xf]
        %v1007 = vld [vmem:[%s7 + $0x20] sm:$0xf]
        %v1008 = vld [vmem:[%s7 + $0x24] sm:$0xf]
        %v1009 = vld [vmem:[%s7 + $0x28] sm:$0xf]
        %v1010 = vld [vmem:[%s7 + $0x2c] sm:$0xf]
        %v1011 = vld [vmem:[%s7 + $0x30] sm:$0xf]
        %v1012 = vld [vmem:[%s7 + $0x34] sm:$0xf]
        %v1013 = vld [vmem:[%s7 + $0x38] sm:$0xf]
        %v1014 = vld [vmem:[%s7 + $0x3c] sm:$0xf]
        %v1015 = vld [vmem:[%s10] sm:$0x1]
        %v1017 = vlaneseq
        %v1018 = vshrl.u32 %v1017, 7
        %v1019 = vsub.s32 0, %v1018
        %v1020 = vrot.slane %v1015, %v1019
        %v1038 = vunpack.c.l.b16 %v999
        %v1039 = vunpack.c.l.b16 %v1000
        %v1040 = vunpack.c.l.b16 %v1001
        %v1041 = vunpack.c.l.b16 %v1002
        %v1042 = vunpack.c.l.b16 %v1003
        %v1043 = vunpack.c.l.b16 %v1004
        %v1044 = vunpack.c.l.b16 %v1005
        %v1045 = vunpack.c.l.b16 %v1006
        %v1046 = vunpack.c.l.b16 %v1007
        %v1047 = vunpack.c.l.b16 %v1008
        %v1048 = vunpack.c.l.b16 %v1009
        %v1049 = vunpack.c.l.b16 %v1010
        %v1050 = vunpack.c.l.b16 %v1011
        %v1051 = vunpack.c.l.b16 %v1012
        %v1052 = vunpack.c.l.b16 %v1013
        %v1053 = vunpack.c.l.b16 %v1014
        %v1054 = vpack.c.b16 %v1039, %v1038
        %v1055 = vpack.c.b16 %v1041, %v1040
        %v1056 = vpack.c.b16 %v1043, %v1042
        %v1057 = vpack.c.b16 %v1045, %v1044
        %v1058 = vpack.c.b16 %v1047, %v1046
        %v1059 = vpack.c.b16 %v1049, %v1048
        %v1060 = vpack.c.b16 %v1051, %v1050
        %v1061 = vpack.c.b16 %v1053, %v1052
        %1070 = vmatprep.subr.bf16.mxu0 0
        %1071 = vmatpush1.bf16.msra.mxu0 %v1054
        %1072 = vmatprep.subr.bf16.mxu0 0
        %1073 = vmatpush1.bf16.msra.mxu0 %v1055
        %1074 = vmatprep.subr.bf16.mxu0 0
        %1075 = vmatpush1.bf16.msra.mxu0 %v1056
        %1076 = vmatprep.subr.bf16.mxu0 0
        %1077 = vmatpush1.bf16.msra.mxu0 %v1057
        %1078 = vmatprep.subr.bf16.mxu0 0
        %1079 = vmatpush1.bf16.msra.mxu0 %v1058
        %1080 = vmatprep.subr.bf16.mxu0 0
        %1081 = vmatpush1.bf16.msra.mxu0 %v1059
        %1082 = vmatprep.subr.bf16.mxu0 0
        %1083 = vmatpush1.bf16.msra.mxu0 %v1060
        %1084 = vmatprep.subr.bf16.mxu0 0
        %1085 = vmatpush1.bf16.msra.mxu0 %v1061
        %1086 = vmatprep.subr.bf16.mxu0 0
        %1087 = vmatpush1.bf16.msra.mxu0 0
        %1088 = vmatprep.subr.bf16.mxu0 0
        %1089 = vmatpush1.bf16.msra.mxu0 0
        %1090 = vmatprep.subr.bf16.mxu0 0
        %1091 = vmatpush1.bf16.msra.mxu0 0
        %1092 = vmatprep.subr.bf16.mxu0 0
        %1093 = vmatpush1.bf16.msra.mxu0 0
        %1094 = vmatprep.subr.bf16.mxu0 0
        %1095 = vmatpush1.bf16.msra.mxu0 0
        %1096 = vmatprep.subr.bf16.mxu0 0
        %1097 = vmatpush1.bf16.msra.mxu0 0
        %1098 = vmatprep.subr.bf16.mxu0 0
        %1099 = vmatpush1.bf16.msra.mxu0 0
        %1100 = vmatprep.subr.bf16.mxu0 0
        %1101 = vmatpush1.bf16.msra.mxu0 0
        %1102 = vmatprep.mubr.bf16.mxu0 0
        %1103 = vmatmul.mubr.bf16.gmra.mrb[0].mxu0 %v998
        %v1104 = vpop.f32.mrb[0].mxu0
        %v1105 = vadd.f32 %v1020, %v1104
        %v1106 = vpop.f32.mrb[0].mxu0
        %v1107 = vpop.f32.mrb[0].mxu0
        %v1108 = vadd.f32 %v1020, %v1107
        %v1109 = vpop.f32.mrb[0].mxu0
        %1110 = vdwg.mxu0
        %v1111 = vpack.c.bf16 %v1108, %v1105
        %v1113 = vunpack.c.l.b16 %v1111
        %v1114 = vunpack.c.h.b16 %v1111
        %v1115 = vpack.c.b16 %v1113, %v1113
        %v1116 = vpack.c.b16 %v1114, %v1114
        %1119 = vst [vmem:[%s11] sm:$0xf] %v1115
        %1120 = vst [vmem:[%s11 + $0x4] sm:$0xf] %v1116
      $region76: #{gcn_forward.1} parent=59 // pred_fallthru
        _
      // Predicated region
      $region77: #{gcn_forward.1} parent=59 // pred_check
        %p1121 = pneg %p280
      $region78: #{gcn_forward.1} parent=59 // pred_check_branch
        %1123 = sbr.rel (%p1121) target = $region80
      $region79: #{gcn_forward.1} parent=59 // pred_region
        _
      $region80: #{gcn_forward.1} parent=59 // pred_fallthru
        _
      // Predicated region
      $region81: #{gcn_forward.1} parent=59 // pred_check
        %p1124 = pneg %p280
      $region82: #{gcn_forward.1} parent=59 // pred_check_branch
        %1126 = sbr.rel (%p1124) target = $region84
      $region83: #{gcn_forward.1} parent=59 // pred_region
        _
      $region84: #{gcn_forward.1} parent=59 // pred_fallthru
        _
    $region60: #{gcn_forward.1} parent=5 // pred_fallthru
      _
    %p1127 = scmp.le.s32.totalorder 2, %s23
    // Predicated region
    $region85: #{gcn_forward.1} parent=5 // pred_check
      %p1128 = pneg %p1127
    $region86: #{gcn_forward.1} parent=5 // pred_check_branch
      %1130 = sbr.rel (%p1128) target = $region88
    $region87: #{gcn_forward.1} parent=5 // pred_region
      %s1131 = ssub.s32 %s23, 2
    $region88: #{gcn_forward.1} parent=5 // pred_fallthru
      _
  $region6: #{gcn_forward.1} parent=0 // loop_footer
    %s27 = sadd.s32 1, %s23
  $region7: #{gcn_forward.1} parent=0 // loop_footer_branch
    %22 = sbr.rel target = $region3
  $region8: #{gcn_forward.1} parent=0 // loop_exit
    _

</llo_original>
